<compile_context>
chip_gen: v7x
topology: tpu7x:2x2x1
jax: 0.10.0
libtpu: 0.0.40
codegen_flags: <defaults>
</compile_context>

<pallas_src>
import jax
import jax.numpy as jnp
from jax.experimental import pallas as pl
from jax.experimental.pallas import tpu as pltpu


# ----------------------------- fused kernel -----------------------------
def _make_kernel(Nb, H, W, Cin, Cout, mxu_dtype):
    WCin = W * Cin
    WCout = W * Cout

    def kernel(x_ref, wt_ref, dwt_ref, aff_ref, o_ref, xpad_ref, ypad_ref):
        # x_ref   : (Nb, H, W*Cin)       Nb images, lane axis = w-major, c-minor
        # wt_ref  : (3, W*Cin, W*Cout)   per-dy Toeplitz 3x3-conv matrices (K = W*Cin)
        # dwt_ref : (9, W*Cout, W*Cout)  per-dy banded channel-diagonal depthwise matrices
        # aff_ref : (4, W*Cout)          [scale1, shift1, scale2, shift2 + b*scale2]
        # o_ref   : (Nb, H, W*Cout)
        # xpad_ref: (Nb, H+2, W*Cin)     VMEM scratch, 1-row vertical halo (3x3 conv)
        # ypad_ref: (Nb, H+8, W*Cout)    VMEM scratch, 4-row vertical halo (9x9 dw conv)

        # ---- stage 1: 3x3 conv as 3 MXU dots (K = W*Cin) + folded BN1 ----
        # zero ONLY the halo rows; interior is fully overwritten every grid step
        xpad_ref[:, 0:1, :] = jnp.zeros((Nb, 1, WCin), mxu_dtype)
        xpad_ref[:, H + 1:H + 2, :] = jnp.zeros((Nb, 1, WCin), mxu_dtype)
        xpad_ref[:, 1:H + 1, :] = x_ref[...]

        acc = jnp.dot(xpad_ref[:, 0:H, :].reshape(Nb * H, WCin), wt_ref[0],
                      preferred_element_type=jnp.float32)
        for dy in range(1, 3):
            acc = acc + jnp.dot(
                xpad_ref[:, dy:dy + H, :].reshape(Nb * H, WCin), wt_ref[dy],
                preferred_element_type=jnp.float32)
        y = acc * aff_ref[0:1, :] + aff_ref[1:2, :]              # (Nb*H, W*Cout) f32

        # ---- stage 2: xUnitS gate, 9x9 depthwise as 9 MXU dots + folded BN2 ----
        ypad_ref[:, 0:4, :] = jnp.zeros((Nb, 4, WCout), mxu_dtype)
        ypad_ref[:, H + 4:H + 8, :] = jnp.zeros((Nb, 4, WCout), mxu_dtype)
        ypad_ref[:, 4:H + 4, :] = y.reshape(Nb, H, WCout).astype(mxu_dtype)

        g = jnp.dot(ypad_ref[:, 0:H, :].reshape(Nb * H, WCout), dwt_ref[0],
                    preferred_element_type=jnp.float32)
        for dy in range(1, 9):
            g = g + jnp.dot(
                ypad_ref[:, dy:dy + H, :].reshape(Nb * H, WCout), dwt_ref[dy],
                preferred_element_type=jnp.float32)
        g = g * aff_ref[2:3, :] + aff_ref[3:4, :]

        # gate = sigmoid(g) via EUP exp + approx reciprocal, one Newton step -> f32 exact
        g = jnp.clip(g, -30.0, 30.0)
        z = 1.0 + jnp.exp(-g)
        r = pl.reciprocal(z, approx=True)
        r = r * (2.0 - z * r)
        o_ref[...] = (y * r).reshape(Nb, H, WCout).astype(o_ref.dtype)

    return kernel


# ----------------------------- wrapper-side weight shaping -----------------------------
def _conv3x3_toeplitz(conv_w, W):
    # conv_w (3, 3, Cin, Cout) HWIO -> (3, W*Cin, W*Cout):
    #   M[dy][(w+dx-1)*Cin + ci, w*Cout + co] = conv_w[dy, dx, ci, co]  (valid w+dx-1 only)
    K, _, Cin, Cout = conv_w.shape
    pad = K // 2
    r = jnp.arange(W)[:, None]
    c = jnp.arange(W)[None, :]
    mats = []
    for dy in range(K):
        M = jnp.zeros((W * Cin, W * Cout), jnp.float32)
        for dx in range(K):
            A = (r == c + (dx - pad)).astype(jnp.float32)          # (W, W) shift band
            M = M + jnp.kron(A, conv_w[dy, dx].astype(jnp.float32))
        mats.append(M)
    return jnp.stack(mats, axis=0)


def _dw9x9_toeplitz(dw_w, W):
    # dw_w (9, 9, C) -> (9, W*C, W*C) banded channel-diagonal matrices:
    #   D[dy][(w+dx-4)*C + ch, w*C + ch] = dw_w[dy, dx, ch]  (valid w+dx-4 only)
    K, _, C = dw_w.shape
    pad = K // 2
    r = jnp.arange(W)[:, None]
    c = jnp.arange(W)[None, :]
    mats = []
    for dy in range(K):
        M = jnp.zeros((W * C, W * C), jnp.float32)
        for dx in range(K):
            A = (r == c + (dx - pad)).astype(jnp.float32)
            M = M + jnp.kron(A, jnp.diag(dw_w[dy, dx].astype(jnp.float32)))
        mats.append(M)
    return jnp.stack(mats, axis=0)


def _pick_block_n(N, max_block=8):
    # largest divisor of N (<= max_block); prefer keeping >= 2 grid steps (v7x has 2 TCs)
    divisors = [d for d in range(1, min(N, max_block) + 1) if N % d == 0]
    two_step = [d for d in divisors if N // d >= 2]
    return max(two_step) if two_step else max(divisors)


def xbasic_block_forward(x_nchw, p, eps=1e-5, mxu_dtype=jnp.float32):
    # mxu_dtype=jnp.bfloat16 doubles MXU issue rate on v6e/v7x (accumulation stays f32);
    # keep f32 (default) on v5e and when validating against the 1e-3 tolerance.
    N, Cin, H, W = x_nchw.shape
    Cout = p["conv_w"].shape[-1]
    WCin, WCout = W * Cin, W * Cout
    Nb = _pick_block_n(N)

    # NCHW -> (N, H, W*Cin): lane axis = W*Cin (lane-dense)
    x_f = jnp.transpose(x_nchw, (0, 2, 3, 1)).reshape(N, H, WCin).astype(mxu_dtype)

    # Fold inference-mode BatchNorms into scale/shift; fold dw-conv bias into shift2.
    scale1 = p["bn1_gamma"] / jnp.sqrt(p["bn1_var"] + eps)
    shift1 = p["bn1_beta"] - p["bn1_mean"] * scale1
    scale2 = p["bn2_gamma"] / jnp.sqrt(p["bn2_var"] + eps)
    shift2 = p["bn2_beta"] - p["bn2_mean"] * scale2 + p["dw_b"] * scale2
    aff = jnp.stack([jnp.tile(scale1, W), jnp.tile(shift1, W),
                     jnp.tile(scale2, W), jnp.tile(shift2, W)], axis=0)   # (4, W*Cout) f32

    wt = _conv3x3_toeplitz(p["conv_w"], W).astype(mxu_dtype)      # (3, W*Cin, W*Cout)
    dwt = _dw9x9_toeplitz(p["dw_w"], W).astype(mxu_dtype)         # (9, W*Cout, W*Cout)

    kernel = _make_kernel(Nb, H, W, Cin, Cout, mxu_dtype)

    flops = N * H * (2 * 3 * WCin * WCout + 2 * 9 * WCout * WCout + 12 * WCout)
    bytes_accessed = int(x_f.size * x_f.dtype.itemsize + N * H * WCout * 4
                         + wt.size * wt.dtype.itemsize + dwt.size * dwt.dtype.itemsize
                         + aff.size * 4)
    cost = pl.CostEstimate(flops=flops, transcendentals=N * H * WCout,
                           bytes_accessed=bytes_accessed)

    out_f = pl.pallas_call(
        kernel,
        out_shape=jax.ShapeDtypeStruct((N, H, WCout), jnp.float32),
        grid_spec=pltpu.PrefetchScalarGridSpec(
            num_scalar_prefetch=0,
            grid=(N // Nb,),
            in_specs=[
                pl.BlockSpec((Nb, H, WCin), lambda n: (n, 0, 0)),
                pl.BlockSpec((3, WCin, WCout), lambda n: (0, 0, 0)),
                pl.BlockSpec((9, WCout, WCout), lambda n: (0, 0, 0)),
                pl.BlockSpec((4, WCout), lambda n: (0, 0)),
            ],
            out_specs=pl.BlockSpec((Nb, H, WCout), lambda n: (n, 0, 0)),
            scratch_shapes=[
                pltpu.VMEM((Nb, H + 2, WCin), mxu_dtype),
                pltpu.VMEM((Nb, H + 8, WCout), mxu_dtype),
            ],
        ),
        compiler_params=pltpu.CompilerParams(
            dimension_semantics=("parallel",),
            vmem_limit_bytes=32 * 1024 * 1024,
        ),
        cost_estimate=cost,
    )(x_f, wt, dwt, aff)

    return jnp.transpose(out_f.reshape(N, H, W, Cout), (0, 3, 1, 2))   # -> NCHW


# ----------------------------- pure-JAX reference (validation only) -----------------------------
def reference_forward(x_nchw, p, eps=1e-5):
    x = jnp.transpose(x_nchw, (0, 2, 3, 1))
    y = jax.lax.conv_general_dilated(
        x, p["conv_w"], window_strides=(1, 1), padding=((1, 1), (1, 1)),
        dimension_numbers=("NHWC", "HWIO", "NHWC"))
    y = (y - p["bn1_mean"]) / jnp.sqrt(p["bn1_var"] + eps) * p["bn1_gamma"] + p["bn1_beta"]
    C = y.shape[-1]
    g = jax.lax.conv_general_dilated(
        y, p["dw_w"].reshape(9, 9, 1, C), window_strides=(1, 1), padding=((4, 4), (4, 4)),
        dimension_numbers=("NHWC", "HWIO", "NHWC"), feature_group_count=C)
    g = g + p["dw_b"]
    g = (g - p["bn2_mean"]) / jnp.sqrt(p["bn2_var"] + eps) * p["bn2_gamma"] + p["bn2_beta"]
    out = y * jax.nn.sigmoid(g)
    return jnp.transpose(out, (0, 3, 1, 2))


def make_params(key, in_channels, out_channels):
    ks = jax.random.split(key, 12)
    return {
        "conv_w": 0.1 * jax.random.normal(ks[0], (3, 3, in_channels, out_channels), jnp.float32),
        "dw_w": 0.1 * jax.random.normal(ks[1], (9, 9, out_channels), jnp.float32),
        "dw_b": 0.05 * jax.random.normal(ks[2], (out_channels,), jnp.float32),
        "bn1_gamma": 1.0 + 0.1 * jax.random.normal(ks[3], (out_channels,), jnp.float32),
        "bn1_beta": 0.1 * jax.random.normal(ks[4], (out_channels,), jnp.float32),
        "bn1_mean": 0.1 * jax.random.normal(ks[5], (out_channels,), jnp.float32),
        "bn1_var": jax.random.uniform(ks[6], (out_channels,), jnp.float32, 0.5, 1.5),
        "bn2_gamma": 1.0 + 0.1 * jax.random.normal(ks[7], (out_channels,), jnp.float32),
        "bn2_beta": 0.1 * jax.random.normal(ks[8], (out_channels,), jnp.float32),
        "bn2_mean": 0.1 * jax.random.normal(ks[9], (out_channels,), jnp.float32),
        "bn2_var": jax.random.uniform(ks[10], (out_channels,), jnp.float32, 0.5, 1.5),
    }


if __name__ == "__main__":
    key = jax.random.PRNGKey(0)
    k_x, k_p = jax.random.split(key)

    # W*C = 128 -> exactly lane-dense; N=4 with Nb=2 gives grid=(2,) and M=32 per dot.
    N, Cin, Cout, H, W = 4, 8, 8, 16, 16
    x = jax.random.normal(k_x, (N, Cin, H, W), jnp.float32)   # NCHW, like PyTorch
    params = make_params(k_p, Cin, Cout)

    out = jax.jit(xbasic_block_forward)(x, params)
    out = jax.block_until_ready(out)

    ref = reference_forward(x, params)
    max_err = float(jnp.max(jnp.abs(out - ref)))
    assert out.shape == (N, Cout, H, W), out.shape
    assert max_err < 1e-3, f"mismatch vs reference: {max_err}"

    print("KERNEL_OK")
</pallas_src>

<mosaic_0001>
module attributes {stable_mosaic.version = 11 : i64} {
  func.func @kernel(%arg0: i32, %arg1: memref<2x16x128xf32, #tpu.memory_space<vmem>>, %arg2: memref<3x128x128xf32, #tpu.memory_space<vmem>>, %arg3: memref<9x128x128xf32, #tpu.memory_space<vmem>>, %arg4: memref<4x128xf32, #tpu.memory_space<vmem>>, %arg5: memref<2x16x128xf32, #tpu.memory_space<vmem>>, %arg6: memref<2x18x128xf32, #tpu.memory_space<vmem>>, %arg7: memref<2x24x128xf32, #tpu.memory_space<vmem>>) attributes {dimension_semantics = [#tpu.dimension_semantics<parallel>], iteration_bounds = array<i64: 2>, scalar_prefetch = 0 : i64, scratch_operands = 2 : i64, tpu.core_type = #tpu.core_type<tc>, window_params = [{transform_indices = @transform_0, window_bounds = array<i64: 2, 16, 128>}, {pipeline_mode = #tpu.pipeline_mode<synchronous>, transform_indices = @transform_1, window_bounds = array<i64: 3, 128, 128>}, {pipeline_mode = #tpu.pipeline_mode<synchronous>, transform_indices = @transform_2, window_bounds = array<i64: 9, 128, 128>}, {pipeline_mode = #tpu.pipeline_mode<synchronous>, transform_indices = @transform_3, window_bounds = array<i64: 4, 128>}, {transform_indices = @transform_4, window_bounds = array<i64: 2, 16, 128>}]} {
    %cst = arith.constant 0.000000e+00 : f32
    %0 = vector.broadcast %cst : f32 to vector<2x1x128xf32>
    %c0 = arith.constant 0 : index
    %c0_0 = arith.constant 0 : index
    %c0_1 = arith.constant 0 : index
    %1 = vector.load %arg6[%c0, %c0_0, %c0_1] : memref<2x18x128xf32, #tpu.memory_space<vmem>>, vector<2x1x128xf32>
    tpu.vector_store %arg6[%c0, %c0_0, %c0_1], %0 {strides = array<i32>} : memref<2x18x128xf32, #tpu.memory_space<vmem>>, vector<2x1x128xf32>,
    %cst_2 = arith.constant 0.000000e+00 : f32
    %2 = vector.broadcast %cst_2 : f32 to vector<2x1x128xf32>
    %c0_3 = arith.constant 0 : index
    %c17 = arith.constant 17 : index
    %c0_4 = arith.constant 0 : index
    %3 = vector.load %arg6[%c0_3, %c17, %c0_4] : memref<2x18x128xf32, #tpu.memory_space<vmem>>, vector<2x1x128xf32>
    tpu.vector_store %arg6[%c0_3, %c17, %c0_4], %2 {strides = array<i32>} : memref<2x18x128xf32, #tpu.memory_space<vmem>>, vector<2x1x128xf32>,
    %c0_5 = arith.constant 0 : index
    %c0_6 = arith.constant 0 : index
    %c0_7 = arith.constant 0 : index
    %4 = vector.load %arg1[%c0_5, %c0_6, %c0_7] : memref<2x16x128xf32, #tpu.memory_space<vmem>>, vector<2x16x128xf32>
    %c0_8 = arith.constant 0 : index
    %c1 = arith.constant 1 : index
    %c0_9 = arith.constant 0 : index
    %5 = vector.load %arg6[%c0_8, %c1, %c0_9] : memref<2x18x128xf32, #tpu.memory_space<vmem>>, vector<2x16x128xf32>
    tpu.vector_store %arg6[%c0_8, %c1, %c0_9], %4 {strides = array<i32>} : memref<2x18x128xf32, #tpu.memory_space<vmem>>, vector<2x16x128xf32>,
    %c0_10 = arith.constant 0 : index
    %c0_11 = arith.constant 0 : index
    %c0_12 = arith.constant 0 : index
    %6 = vector.load %arg6[%c0_10, %c0_11, %c0_12] : memref<2x18x128xf32, #tpu.memory_space<vmem>>, vector<2x16x128xf32>
    %7 = vector.shape_cast %6 : vector<2x16x128xf32> to vector<32x128xf32>
    %c0_13 = arith.constant 0 : index
    %c0_14 = arith.constant 0 : index
    %c0_15 = arith.constant 0 : index
    %8 = vector.load %arg2[%c0_13, %c0_14, %c0_15] : memref<3x128x128xf32, #tpu.memory_space<vmem>>, vector<1x128x128xf32>
    %9 = vector.shape_cast %8 : vector<1x128x128xf32> to vector<128x128xf32>
    %cst_16 = arith.constant dense<0.000000e+00> : vector<32x128xf32>
    %10 = tpu.matmul %7, %9, %cst_16 {dimension_numbers = #tpu.dot_dimension_numbers<[1], [0], [0], [1], [0, 0, 1, 1], [], []>} : vector<32x128xf32>, vector<128x128xf32>, vector<32x128xf32> -> vector<32x128xf32>
    %c0_17 = arith.constant 0 : index
    %c1_18 = arith.constant 1 : index
    %c0_19 = arith.constant 0 : index
    %11 = vector.load %arg6[%c0_17, %c1_18, %c0_19] : memref<2x18x128xf32, #tpu.memory_space<vmem>>, vector<2x16x128xf32>
    %12 = vector.shape_cast %11 : vector<2x16x128xf32> to vector<32x128xf32>
    %c1_20 = arith.constant 1 : index
    %c0_21 = arith.constant 0 : index
    %c0_22 = arith.constant 0 : index
    %13 = vector.load %arg2[%c1_20, %c0_21, %c0_22] : memref<3x128x128xf32, #tpu.memory_space<vmem>>, vector<1x128x128xf32>
    %14 = vector.shape_cast %13 : vector<1x128x128xf32> to vector<128x128xf32>
    %cst_23 = arith.constant dense<0.000000e+00> : vector<32x128xf32>
    %15 = tpu.matmul %12, %14, %cst_23 {dimension_numbers = #tpu.dot_dimension_numbers<[1], [0], [0], [1], [0, 0, 1, 1], [], []>} : vector<32x128xf32>, vector<128x128xf32>, vector<32x128xf32> -> vector<32x128xf32>
    %16 = arith.addf %10, %15 : vector<32x128xf32>
    %c0_24 = arith.constant 0 : index
    %c2 = arith.constant 2 : index
    %c0_25 = arith.constant 0 : index
    %17 = vector.load %arg6[%c0_24, %c2, %c0_25] : memref<2x18x128xf32, #tpu.memory_space<vmem>>, vector<2x16x128xf32>
    %18 = vector.shape_cast %17 : vector<2x16x128xf32> to vector<32x128xf32>
    %c2_26 = arith.constant 2 : index
    %c0_27 = arith.constant 0 : index
    %c0_28 = arith.constant 0 : index
    %19 = vector.load %arg2[%c2_26, %c0_27, %c0_28] : memref<3x128x128xf32, #tpu.memory_space<vmem>>, vector<1x128x128xf32>
    %20 = vector.shape_cast %19 : vector<1x128x128xf32> to vector<128x128xf32>
    %cst_29 = arith.constant dense<0.000000e+00> : vector<32x128xf32>
    %21 = tpu.matmul %18, %20, %cst_29 {dimension_numbers = #tpu.dot_dimension_numbers<[1], [0], [0], [1], [0, 0, 1, 1], [], []>} : vector<32x128xf32>, vector<128x128xf32>, vector<32x128xf32> -> vector<32x128xf32>
    %22 = arith.addf %16, %21 : vector<32x128xf32>
    %c0_30 = arith.constant 0 : index
    %c0_31 = arith.constant 0 : index
    %23 = vector.load %arg4[%c0_30, %c0_31] : memref<4x128xf32, #tpu.memory_space<vmem>>, vector<1x128xf32>
    %24 = vector.broadcast %23 : vector<1x128xf32> to vector<32x128xf32>
    %25 = arith.mulf %22, %24 : vector<32x128xf32>
    %c1_32 = arith.constant 1 : index
    %c0_33 = arith.constant 0 : index
    %26 = vector.load %arg4[%c1_32, %c0_33] : memref<4x128xf32, #tpu.memory_space<vmem>>, vector<1x128xf32>
    %27 = vector.broadcast %26 : vector<1x128xf32> to vector<32x128xf32>
    %28 = arith.addf %25, %27 : vector<32x128xf32>
    %cst_34 = arith.constant 0.000000e+00 : f32
    %29 = vector.broadcast %cst_34 : f32 to vector<2x4x128xf32>
    %c0_35 = arith.constant 0 : index
    %c0_36 = arith.constant 0 : index
    %c0_37 = arith.constant 0 : index
    %30 = vector.load %arg7[%c0_35, %c0_36, %c0_37] : memref<2x24x128xf32, #tpu.memory_space<vmem>>, vector<2x4x128xf32>
    tpu.vector_store %arg7[%c0_35, %c0_36, %c0_37], %29 {strides = array<i32>} : memref<2x24x128xf32, #tpu.memory_space<vmem>>, vector<2x4x128xf32>,
    %cst_38 = arith.constant 0.000000e+00 : f32
    %31 = vector.broadcast %cst_38 : f32 to vector<2x4x128xf32>
    %c0_39 = arith.constant 0 : index
    %c20 = arith.constant 20 : index
    %c0_40 = arith.constant 0 : index
    %32 = vector.load %arg7[%c0_39, %c20, %c0_40] : memref<2x24x128xf32, #tpu.memory_space<vmem>>, vector<2x4x128xf32>
    tpu.vector_store %arg7[%c0_39, %c20, %c0_40], %31 {strides = array<i32>} : memref<2x24x128xf32, #tpu.memory_space<vmem>>, vector<2x4x128xf32>,
    %33 = vector.shape_cast %28 : vector<32x128xf32> to vector<2x16x128xf32>
    %c0_41 = arith.constant 0 : index
    %c4 = arith.constant 4 : index
    %c0_42 = arith.constant 0 : index
    %34 = vector.load %arg7[%c0_41, %c4, %c0_42] : memref<2x24x128xf32, #tpu.memory_space<vmem>>, vector<2x16x128xf32>
    tpu.vector_store %arg7[%c0_41, %c4, %c0_42], %33 {strides = array<i32>} : memref<2x24x128xf32, #tpu.memory_space<vmem>>, vector<2x16x128xf32>,
    %c0_43 = arith.constant 0 : index
    %c0_44 = arith.constant 0 : index
    %c0_45 = arith.constant 0 : index
    %35 = vector.load %arg7[%c0_43, %c0_44, %c0_45] : memref<2x24x128xf32, #tpu.memory_space<vmem>>, vector<2x16x128xf32>
    %36 = vector.shape_cast %35 : vector<2x16x128xf32> to vector<32x128xf32>
    %c0_46 = arith.constant 0 : index
    %c0_47 = arith.constant 0 : index
    %c0_48 = arith.constant 0 : index
    %37 = vector.load %arg3[%c0_46, %c0_47, %c0_48] : memref<9x128x128xf32, #tpu.memory_space<vmem>>, vector<1x128x128xf32>
    %38 = vector.shape_cast %37 : vector<1x128x128xf32> to vector<128x128xf32>
    %cst_49 = arith.constant dense<0.000000e+00> : vector<32x128xf32>
    %39 = tpu.matmul %36, %38, %cst_49 {dimension_numbers = #tpu.dot_dimension_numbers<[1], [0], [0], [1], [0, 0, 1, 1], [], []>} : vector<32x128xf32>, vector<128x128xf32>, vector<32x128xf32> -> vector<32x128xf32>
    %c0_50 = arith.constant 0 : index
    %c1_51 = arith.constant 1 : index
    %c0_52 = arith.constant 0 : index
    %40 = vector.load %arg7[%c0_50, %c1_51, %c0_52] : memref<2x24x128xf32, #tpu.memory_space<vmem>>, vector<2x16x128xf32>
    %41 = vector.shape_cast %40 : vector<2x16x128xf32> to vector<32x128xf32>
    %c1_53 = arith.constant 1 : index
    %c0_54 = arith.constant 0 : index
    %c0_55 = arith.constant 0 : index
    %42 = vector.load %arg3[%c1_53, %c0_54, %c0_55] : memref<9x128x128xf32, #tpu.memory_space<vmem>>, vector<1x128x128xf32>
    %43 = vector.shape_cast %42 : vector<1x128x128xf32> to vector<128x128xf32>
    %cst_56 = arith.constant dense<0.000000e+00> : vector<32x128xf32>
    %44 = tpu.matmul %41, %43, %cst_56 {dimension_numbers = #tpu.dot_dimension_numbers<[1], [0], [0], [1], [0, 0, 1, 1], [], []>} : vector<32x128xf32>, vector<128x128xf32>, vector<32x128xf32> -> vector<32x128xf32>
    %45 = arith.addf %39, %44 : vector<32x128xf32>
    %c0_57 = arith.constant 0 : index
    %c2_58 = arith.constant 2 : index
    %c0_59 = arith.constant 0 : index
    %46 = vector.load %arg7[%c0_57, %c2_58, %c0_59] : memref<2x24x128xf32, #tpu.memory_space<vmem>>, vector<2x16x128xf32>
    %47 = vector.shape_cast %46 : vector<2x16x128xf32> to vector<32x128xf32>
    %c2_60 = arith.constant 2 : index
    %c0_61 = arith.constant 0 : index
    %c0_62 = arith.constant 0 : index
    %48 = vector.load %arg3[%c2_60, %c0_61, %c0_62] : memref<9x128x128xf32, #tpu.memory_space<vmem>>, vector<1x128x128xf32>
    %49 = vector.shape_cast %48 : vector<1x128x128xf32> to vector<128x128xf32>
    %cst_63 = arith.constant dense<0.000000e+00> : vector<32x128xf32>
    %50 = tpu.matmul %47, %49, %cst_63 {dimension_numbers = #tpu.dot_dimension_numbers<[1], [0], [0], [1], [0, 0, 1, 1], [], []>} : vector<32x128xf32>, vector<128x128xf32>, vector<32x128xf32> -> vector<32x128xf32>
    %51 = arith.addf %45, %50 : vector<32x128xf32>
    %c0_64 = arith.constant 0 : index
    %c3 = arith.constant 3 : index
    %c0_65 = arith.constant 0 : index
    %52 = vector.load %arg7[%c0_64, %c3, %c0_65] : memref<2x24x128xf32, #tpu.memory_space<vmem>>, vector<2x16x128xf32>
    %53 = vector.shape_cast %52 : vector<2x16x128xf32> to vector<32x128xf32>
    %c3_66 = arith.constant 3 : index
    %c0_67 = arith.constant 0 : index
    %c0_68 = arith.constant 0 : index
    %54 = vector.load %arg3[%c3_66, %c0_67, %c0_68] : memref<9x128x128xf32, #tpu.memory_space<vmem>>, vector<1x128x128xf32>
    %55 = vector.shape_cast %54 : vector<1x128x128xf32> to vector<128x128xf32>
    %cst_69 = arith.constant dense<0.000000e+00> : vector<32x128xf32>
    %56 = tpu.matmul %53, %55, %cst_69 {dimension_numbers = #tpu.dot_dimension_numbers<[1], [0], [0], [1], [0, 0, 1, 1], [], []>} : vector<32x128xf32>, vector<128x128xf32>, vector<32x128xf32> -> vector<32x128xf32>
    %57 = arith.addf %51, %56 : vector<32x128xf32>
    %c0_70 = arith.constant 0 : index
    %c4_71 = arith.constant 4 : index
    %c0_72 = arith.constant 0 : index
    %58 = vector.load %arg7[%c0_70, %c4_71, %c0_72] : memref<2x24x128xf32, #tpu.memory_space<vmem>>, vector<2x16x128xf32>
    %59 = vector.shape_cast %58 : vector<2x16x128xf32> to vector<32x128xf32>
    %c4_73 = arith.constant 4 : index
    %c0_74 = arith.constant 0 : index
    %c0_75 = arith.constant 0 : index
    %60 = vector.load %arg3[%c4_73, %c0_74, %c0_75] : memref<9x128x128xf32, #tpu.memory_space<vmem>>, vector<1x128x128xf32>
    %61 = vector.shape_cast %60 : vector<1x128x128xf32> to vector<128x128xf32>
    %cst_76 = arith.constant dense<0.000000e+00> : vector<32x128xf32>
    %62 = tpu.matmul %59, %61, %cst_76 {dimension_numbers = #tpu.dot_dimension_numbers<[1], [0], [0], [1], [0, 0, 1, 1], [], []>} : vector<32x128xf32>, vector<128x128xf32>, vector<32x128xf32> -> vector<32x128xf32>
    %63 = arith.addf %57, %62 : vector<32x128xf32>
    %c0_77 = arith.constant 0 : index
    %c5 = arith.constant 5 : index
    %c0_78 = arith.constant 0 : index
    %64 = vector.load %arg7[%c0_77, %c5, %c0_78] : memref<2x24x128xf32, #tpu.memory_space<vmem>>, vector<2x16x128xf32>
    %65 = vector.shape_cast %64 : vector<2x16x128xf32> to vector<32x128xf32>
    %c5_79 = arith.constant 5 : index
    %c0_80 = arith.constant 0 : index
    %c0_81 = arith.constant 0 : index
    %66 = vector.load %arg3[%c5_79, %c0_80, %c0_81] : memref<9x128x128xf32, #tpu.memory_space<vmem>>, vector<1x128x128xf32>
    %67 = vector.shape_cast %66 : vector<1x128x128xf32> to vector<128x128xf32>
    %cst_82 = arith.constant dense<0.000000e+00> : vector<32x128xf32>
    %68 = tpu.matmul %65, %67, %cst_82 {dimension_numbers = #tpu.dot_dimension_numbers<[1], [0], [0], [1], [0, 0, 1, 1], [], []>} : vector<32x128xf32>, vector<128x128xf32>, vector<32x128xf32> -> vector<32x128xf32>
    %69 = arith.addf %63, %68 : vector<32x128xf32>
    %c0_83 = arith.constant 0 : index
    %c6 = arith.constant 6 : index
    %c0_84 = arith.constant 0 : index
    %70 = vector.load %arg7[%c0_83, %c6, %c0_84] : memref<2x24x128xf32, #tpu.memory_space<vmem>>, vector<2x16x128xf32>
    %71 = vector.shape_cast %70 : vector<2x16x128xf32> to vector<32x128xf32>
    %c6_85 = arith.constant 6 : index
    %c0_86 = arith.constant 0 : index
    %c0_87 = arith.constant 0 : index
    %72 = vector.load %arg3[%c6_85, %c0_86, %c0_87] : memref<9x128x128xf32, #tpu.memory_space<vmem>>, vector<1x128x128xf32>
    %73 = vector.shape_cast %72 : vector<1x128x128xf32> to vector<128x128xf32>
    %cst_88 = arith.constant dense<0.000000e+00> : vector<32x128xf32>
    %74 = tpu.matmul %71, %73, %cst_88 {dimension_numbers = #tpu.dot_dimension_numbers<[1], [0], [0], [1], [0, 0, 1, 1], [], []>} : vector<32x128xf32>, vector<128x128xf32>, vector<32x128xf32> -> vector<32x128xf32>
    %75 = arith.addf %69, %74 : vector<32x128xf32>
    %c0_89 = arith.constant 0 : index
    %c7 = arith.constant 7 : index
    %c0_90 = arith.constant 0 : index
    %76 = vector.load %arg7[%c0_89, %c7, %c0_90] : memref<2x24x128xf32, #tpu.memory_space<vmem>>, vector<2x16x128xf32>
    %77 = vector.shape_cast %76 : vector<2x16x128xf32> to vector<32x128xf32>
    %c7_91 = arith.constant 7 : index
    %c0_92 = arith.constant 0 : index
    %c0_93 = arith.constant 0 : index
    %78 = vector.load %arg3[%c7_91, %c0_92, %c0_93] : memref<9x128x128xf32, #tpu.memory_space<vmem>>, vector<1x128x128xf32>
    %79 = vector.shape_cast %78 : vector<1x128x128xf32> to vector<128x128xf32>
    %cst_94 = arith.constant dense<0.000000e+00> : vector<32x128xf32>
    %80 = tpu.matmul %77, %79, %cst_94 {dimension_numbers = #tpu.dot_dimension_numbers<[1], [0], [0], [1], [0, 0, 1, 1], [], []>} : vector<32x128xf32>, vector<128x128xf32>, vector<32x128xf32> -> vector<32x128xf32>
    %81 = arith.addf %75, %80 : vector<32x128xf32>
    %c0_95 = arith.constant 0 : index
    %c8 = arith.constant 8 : index
    %c0_96 = arith.constant 0 : index
    %82 = vector.load %arg7[%c0_95, %c8, %c0_96] : memref<2x24x128xf32, #tpu.memory_space<vmem>>, vector<2x16x128xf32>
    %83 = vector.shape_cast %82 : vector<2x16x128xf32> to vector<32x128xf32>
    %c8_97 = arith.constant 8 : index
    %c0_98 = arith.constant 0 : index
    %c0_99 = arith.constant 0 : index
    %84 = vector.load %arg3[%c8_97, %c0_98, %c0_99] : memref<9x128x128xf32, #tpu.memory_space<vmem>>, vector<1x128x128xf32>
    %85 = vector.shape_cast %84 : vector<1x128x128xf32> to vector<128x128xf32>
    %cst_100 = arith.constant dense<0.000000e+00> : vector<32x128xf32>
    %86 = tpu.matmul %83, %85, %cst_100 {dimension_numbers = #tpu.dot_dimension_numbers<[1], [0], [0], [1], [0, 0, 1, 1], [], []>} : vector<32x128xf32>, vector<128x128xf32>, vector<32x128xf32> -> vector<32x128xf32>
    %87 = arith.addf %81, %86 : vector<32x128xf32>
    %c2_101 = arith.constant 2 : index
    %c0_102 = arith.constant 0 : index
    %88 = vector.load %arg4[%c2_101, %c0_102] : memref<4x128xf32, #tpu.memory_space<vmem>>, vector<1x128xf32>
    %89 = vector.broadcast %88 : vector<1x128xf32> to vector<32x128xf32>
    %90 = arith.mulf %87, %89 : vector<32x128xf32>
    %c3_103 = arith.constant 3 : index
    %c0_104 = arith.constant 0 : index
    %91 = vector.load %arg4[%c3_103, %c0_104] : memref<4x128xf32, #tpu.memory_space<vmem>>, vector<1x128xf32>
    %92 = vector.broadcast %91 : vector<1x128xf32> to vector<32x128xf32>
    %93 = arith.addf %90, %92 : vector<32x128xf32>
    %cst_105 = arith.constant -3.000000e+01 : f32
    %cst_106 = arith.constant 3.000000e+01 : f32
    %94 = vector.broadcast %cst_105 : f32 to vector<32x128xf32>
    %95 = arith.maximumf %94, %93 : vector<32x128xf32>
    %96 = vector.broadcast %cst_106 : f32 to vector<32x128xf32>
    %97 = arith.minimumf %96, %95 : vector<32x128xf32>
    %cst_107 = arith.constant 0.000000e+00 : f32
    %98 = vector.broadcast %cst_107 : f32 to vector<32x128xf32>
    %99 = arith.subf %98, %97 : vector<32x128xf32>
    %100 = math.exp %99 : vector<32x128xf32>
    %cst_108 = arith.constant 1.000000e+00 : f32
    %101 = vector.broadcast %cst_108 : f32 to vector<32x128xf32>
    %102 = arith.addf %101, %100 : vector<32x128xf32>
    %103 = tpu.reciprocal %102 {approx = true} : vector<32x128xf32> -> vector<32x128xf32>
    %104 = arith.mulf %102, %103 : vector<32x128xf32>
    %cst_109 = arith.constant 2.000000e+00 : f32
    %105 = vector.broadcast %cst_109 : f32 to vector<32x128xf32>
    %106 = arith.subf %105, %104 : vector<32x128xf32>
    %107 = arith.mulf %103, %106 : vector<32x128xf32>
    %108 = arith.mulf %28, %107 : vector<32x128xf32>
    %109 = vector.shape_cast %108 : vector<32x128xf32> to vector<2x16x128xf32>
    %c0_110 = arith.constant 0 : index
    %c0_111 = arith.constant 0 : index
    %c0_112 = arith.constant 0 : index
    %110 = vector.load %arg5[%c0_110, %c0_111, %c0_112] : memref<2x16x128xf32, #tpu.memory_space<vmem>>, vector<2x16x128xf32>
    tpu.vector_store %arg5[%c0_110, %c0_111, %c0_112], %109 {strides = array<i32>} : memref<2x16x128xf32, #tpu.memory_space<vmem>>, vector<2x16x128xf32>,
    return
  }
  func.func @transform_0(%arg0: i32) -> (i32, i32, i32) {
    %c0_i32 = arith.constant 0 : i32
    %c0_i32_0 = arith.constant 0 : i32
    %c0_i32_1 = arith.constant 0 : i32
    return %arg0, %c0_i32, %c0_i32_0 : i32, i32, i32
  }
  func.func @transform_1(%arg0: i32) -> (i32, i32, i32) {
    %c0_i32 = arith.constant 0 : i32
    %c0_i32_0 = arith.constant 0 : i32
    %c0_i32_1 = arith.constant 0 : i32
    %c0_i32_2 = arith.constant 0 : i32
    return %c0_i32, %c0_i32_0, %c0_i32_1 : i32, i32, i32
  }
  func.func @transform_2(%arg0: i32) -> (i32, i32, i32) {
    %c0_i32 = arith.constant 0 : i32
    %c0_i32_0 = arith.constant 0 : i32
    %c0_i32_1 = arith.constant 0 : i32
    %c0_i32_2 = arith.constant 0 : i32
    return %c0_i32, %c0_i32_0, %c0_i32_1 : i32, i32, i32
  }
  func.func @transform_3(%arg0: i32) -> (i32, i32) {
    %c0_i32 = arith.constant 0 : i32
    %c0_i32_0 = arith.constant 0 : i32
    %c0_i32_1 = arith.constant 0 : i32
    return %c0_i32, %c0_i32_0 : i32, i32
  }
  func.func @transform_4(%arg0: i32) -> (i32, i32, i32) {
    %c0_i32 = arith.constant 0 : i32
    %c0_i32_0 = arith.constant 0 : i32
    %c0_i32_1 = arith.constant 0 : i32
    return %arg0, %c0_i32, %c0_i32_0 : i32, i32, i32
  }
}

</mosaic_0001>

<llo_original>
// kernel: tile.35
$region0: #{tile.35}
  #allocation0 [shape = 's32[1]{0}', space=sflag, size = 0x4, scoped, tag = 'scoped memory for tile.35']
  %s0 = inlined_call_operand.vmem [shape: f32[8], index: 0, kind: input, shape index: {}]
  %s1 = inlined_call_operand.vmem [shape: f32[16,8], index: 1, kind: output, shape index: {}]
  // Predicated region
  $region2: #{tile.35} parent=0 // pred_check
    _
  $region3: #{tile.35} parent=0 // pred_check_branch
    %3 = sbr.rel (0) target = $region5
  $region4: #{tile.35} parent=0 // pred_region
    _
  $region5: #{tile.35} parent=0 // pred_fallthru
    _
  %v4 = vld [vmem:[%s0] ss:$0 sm:$0xff]
  %5 = vst [vmem:[%s1] sm:$0xff] %v4
  %s6 = scalar_lea.vmem %s1, 8
  %7 = vst [vmem:[%s6] sm:$0xff] %v4

// kernel: tile.39
$region0: #{tile.39}
  %s0 = inlined_call_operand.vmem [shape: f32[16,8], index: 0, kind: input, shape index: {}]
  %s1 = inlined_call_operand.vmem [shape: f32[1,128], index: 1, kind: output, shape index: {}]
  $region1: #{tile.39} parent=0
    #allocation0 [shape = 'u8[4096]{0}', space=vmem, size = 0x1000, scoped, tag = 'scoped mem for output reshape']
    %v2 = vld [vmem:[%s0] sm:$0x1]
    %vm3 = vcmask 64512
    %4 = vst.msk [vmem:[#allocation0] sm:$0x1] %vm3, %v2
    %s5 = scalar_lea.vmem %s0, 15
    %v6 = vld [vmem:[%s5] sm:$0x1]
    %7 = vrot.lane.b32.xlu0 %v6, 120
    %v8 = vpop.permute.xlu0 %7
    %vm9 = vcmask 1048512
    %10 = vst.msk [vmem:[#allocation0] sm:$0x1] %vm9, %v8
    %s11 = scalar_lea.vmem %s0, 14
    %v12 = vld [vmem:[%s11] sm:$0x1]
    %13 = vrot.lane.b32.xlu0 %v12, 112
    %v14 = vpop.permute.xlu0 %13
    %vm15 = vcmask 982912
    %16 = vst.msk [vmem:[#allocation0] sm:$0x1] %vm15, %v14
    %s17 = scalar_lea.vmem %s0, 13
    %v18 = vld [vmem:[%s17] sm:$0x1]
    %19 = vrot.lane.b32.xlu0 %v18, 104
    %v20 = vpop.permute.xlu0 %19
    %vm21 = vcmask 917312
    %22 = vst.msk [vmem:[#allocation0] sm:$0x1] %vm21, %v20
    %s23 = scalar_lea.vmem %s0, 12
    %v24 = vld [vmem:[%s23] sm:$0x1]
    %25 = vrot.lane.b32.xlu0 %v24, 96
    %v26 = vpop.permute.xlu0 %25
    %vm27 = vcmask 851712
    %28 = vst.msk [vmem:[#allocation0] sm:$0x1] %vm27, %v26
    %s29 = scalar_lea.vmem %s0, 11
    %v30 = vld [vmem:[%s29] sm:$0x1]
    %31 = vrot.lane.b32.xlu0 %v30, 88
    %v32 = vpop.permute.xlu0 %31
    %vm33 = vcmask 786112
    %34 = vst.msk [vmem:[#allocation0] sm:$0x1] %vm33, %v32
    %s35 = scalar_lea.vmem %s0, 10
    %v36 = vld [vmem:[%s35] sm:$0x1]
    %37 = vrot.lane.b32.xlu0 %v36, 80
    %v38 = vpop.permute.xlu0 %37
    %vm39 = vcmask 720512
    %40 = vst.msk [vmem:[#allocation0] sm:$0x1] %vm39, %v38
    %s41 = scalar_lea.vmem %s0, 9
    %v42 = vld [vmem:[%s41] sm:$0x1]
    %43 = vrot.lane.b32.xlu0 %v42, 72
    %v44 = vpop.permute.xlu0 %43
    %vm45 = vcmask 654912
    %46 = vst.msk [vmem:[#allocation0] sm:$0x1] %vm45, %v44
    %s47 = scalar_lea.vmem %s0, 8
    %v48 = vld [vmem:[%s47] sm:$0x1]
    %49 = vrot.lane.b32.xlu0 %v48, 64
    %v50 = vpop.permute.xlu0 %49
    %vm51 = vcmask 589312
    %52 = vst.msk [vmem:[#allocation0] sm:$0x1] %vm51, %v50
    %s53 = scalar_lea.vmem %s0, 7
    %v54 = vld [vmem:[%s53] sm:$0x1]
    %55 = vrot.lane.b32.xlu0 %v54, 56
    %v56 = vpop.permute.xlu0 %55
    %vm57 = vcmask 523712
    %58 = vst.msk [vmem:[#allocation0] sm:$0x1] %vm57, %v56
    %s59 = scalar_lea.vmem %s0, 6
    %v60 = vld [vmem:[%s59] sm:$0x1]
    %61 = vrot.lane.b32.xlu0 %v60, 48
    %v62 = vpop.permute.xlu0 %61
    %vm63 = vcmask 458112
    %64 = vst.msk [vmem:[#allocation0] sm:$0x1] %vm63, %v62
    %s65 = scalar_lea.vmem %s0, 5
    %v66 = vld [vmem:[%s65] sm:$0x1]
    %67 = vrot.lane.b32.xlu0 %v66, 40
    %v68 = vpop.permute.xlu0 %67
    %vm69 = vcmask 392512
    %70 = vst.msk [vmem:[#allocation0] sm:$0x1] %vm69, %v68
    %s71 = scalar_lea.vmem %s0, 4
    %v72 = vld [vmem:[%s71] sm:$0x1]
    %73 = vrot.lane.b32.xlu0 %v72, 32
    %v74 = vpop.permute.xlu0 %73
    %vm75 = vcmask 326912
    %76 = vst.msk [vmem:[#allocation0] sm:$0x1] %vm75, %v74
    %s77 = scalar_lea.vmem %s0, 3
    %v78 = vld [vmem:[%s77] sm:$0x1]
    %79 = vrot.lane.b32.xlu0 %v78, 24
    %v80 = vpop.permute.xlu0 %79
    %vm81 = vcmask 261312
    %82 = vst.msk [vmem:[#allocation0] sm:$0x1] %vm81, %v80
    %s83 = scalar_lea.vmem %s0, 2
    %v84 = vld [vmem:[%s83] sm:$0x1]
    %85 = vrot.lane.b32.xlu0 %v84, 16
    %v86 = vpop.permute.xlu0 %85
    %vm87 = vcmask 195712
    %88 = vst.msk [vmem:[#allocation0] sm:$0x1] %vm87, %v86
    %s89 = scalar_lea.vmem %s0, 1
    %v90 = vld [vmem:[%s89] sm:$0x1]
    %91 = vrot.lane.b32.xlu0 %v90, 8
    %v92 = vpop.permute.xlu0 %91
    %vm93 = vcmask 130112
    %94 = vst.msk [vmem:[#allocation0] sm:$0x1] %vm93, %v92
    %s96 = sshllo.u32 0, 1
    %v98 = vld [vmem:[#allocation0] sm:%s96]
    %s99 = sshllo.u32 0, 1
    %100 = vst [vmem:[%s1] sm:%s99] %v98

// kernel: xbasic_block_forward.1
$region0: #{xbasic_block_forward.1}
  #allocation0 [shape = 'u32[]', space=smem, size = 0x4, offset = 0x4, fixed_abs, tag = 'smem constant byte address 0x4 - core index']
  #allocation1 [shape = 'u32[144,128]{1,0:T(1,128)}', space=vmem, size = 0x12000, scoped, tag = 'internal scratch']
  #allocation2 [shape = 'f32[2,18,128]{2,1,0:T(8,128)}', space=vmem, size = 0x6000, scoped, tag = 'scratch operand']
  #allocation3 [shape = 'f32[2,24,128]{2,1,0:T(8,128)}', space=vmem, size = 0x6000, scoped, tag = 'scratch operand']
  %s0 = inlined_call_operand.vmem [shape: f32[4,16,128], index: 0, kind: input, shape index: {}]
  %s1 = inlined_call_operand.vmem [shape: f32[3,128,128], index: 1, kind: input, shape index: {}]
  %s2 = inlined_call_operand.vmem [shape: f32[9,128,128], index: 2, kind: input, shape index: {}]
  %s3 = inlined_call_operand.vmem [shape: f32[4,128], index: 3, kind: input, shape index: {}]
  %s4 = inlined_call_operand.vmem [shape: f32[4,16,128], index: 4, kind: output, shape index: {}]
  %s5 = sld [smem:[#allocation0]]
  $region49: #{xbasic_block_forward.1} parent=0
    _
  %s7 = ssub.s32 1, %s5
  %s8 = scalar_select 0, %s7, %s5
  loop: start=0, step=1, limit=4
  $region2: #{xbasic_block_forward.1} parent=0 // loop_pre_header
    _
  $region3: #{xbasic_block_forward.1} parent=0 // loop_header
    %s10 = sphi 0, %s14
    %p11 = scmp.ge.s32.totalorder %s10, 4
    %s20 = sphi 0, %s22
    %s23 = sphi 0, %s20
    %s24 = sphi 0, %s23
    %s40 = sphi 0, %s24
    %s44 = sphi 0, %s44
    %s46 = sphi 0, %s44
    %s47 = sphi 0, %s46
    %s61 = sphi 0, %s47
    %s65 = sphi 0, %s65
    %s67 = sphi 0, %s65
    %s68 = sphi 0, %s67
    %s82 = sphi 0, %s68
    %s86 = sphi 0, %s86
    %s88 = sphi 0, %s86
    %s89 = sphi 0, %s88
    %s103 = sphi 0, %s89
    %s109 = sphi 0, %s111
    %s112 = sphi 0, %s109
    %s113 = sphi 0, %s112
    %s129 = sphi 0, %s113
  $region4: #{xbasic_block_forward.1} parent=0 // loop_header_branch
    %13 = sbr.rel (%p11) target = $region8
  $region5: #{xbasic_block_forward.1} parent=0 // loop_body
    %s15 = ssub.s32 %s10, 1
    %s16 = ssub.s32 %s10, 2
    %s17 = sadd.s32 %s10, 1
    %s18 = ssub.s32 %s10, %s17
    %p19 = scmp.eq.s32.totalorder %s18, 0
    %s21 = sadd.s32 %s20, 1
    %s22 = scalar_select %p19, %s20, %s21
    %p25 = pneg %p19
    %p26 = scmp.eq.s32.totalorder %s10, 1
    %p27 = por %p25, %p26
    %p28 = scmp.ne.s32.totalorder %s20, %s23
    %p29 = scmp.eq.s32.totalorder %s10, 0
    %p30 = por %p28, %p29
    %p31 = scmp.ne.s32.totalorder %s20, %s23
    %p32 = scmp.eq.s32.totalorder %s15, 1
    %p33 = por %p31, %p32
    %p34 = scmp.ne.s32.totalorder %s23, %s24
    %p35 = scmp.eq.s32.totalorder %s15, 0
    %p36 = por %p34, %p35
    %p37 = scmp.ne.s32.totalorder %s23, %s24
    %p38 = scmp.eq.s32.totalorder %s16, 1
    %p39 = por %p37, %p38
    %p41 = scmp.ne.s32.totalorder %s24, %s40
    %p42 = scmp.eq.s32.totalorder %s16, 0
    %p43 = por %p41, %p42
    %s45 = sadd.s32 %s44, 1
    %p48 = scmp.eq.s32.totalorder %s10, 1
    %p49 = scmp.ne.s32.totalorder %s44, %s46
    %p50 = scmp.eq.s32.totalorder %s10, 0
    %p51 = por %p49, %p50
    %p52 = scmp.ne.s32.totalorder %s44, %s46
    %p53 = scmp.eq.s32.totalorder %s15, 1
    %p54 = por %p52, %p53
    %p55 = scmp.ne.s32.totalorder %s46, %s47
    %p56 = scmp.eq.s32.totalorder %s15, 0
    %p57 = por %p55, %p56
    %p58 = scmp.ne.s32.totalorder %s46, %s47
    %p59 = scmp.eq.s32.totalorder %s16, 1
    %p60 = por %p58, %p59
    %p62 = scmp.ne.s32.totalorder %s47, %s61
    %p63 = scmp.eq.s32.totalorder %s16, 0
    %p64 = por %p62, %p63
    %s66 = sadd.s32 %s65, 1
    %p69 = scmp.eq.s32.totalorder %s10, 1
    %p70 = scmp.ne.s32.totalorder %s65, %s67
    %p71 = scmp.eq.s32.totalorder %s10, 0
    %p72 = por %p70, %p71
    %p73 = scmp.ne.s32.totalorder %s65, %s67
    %p74 = scmp.eq.s32.totalorder %s15, 1
    %p75 = por %p73, %p74
    %p76 = scmp.ne.s32.totalorder %s67, %s68
    %p77 = scmp.eq.s32.totalorder %s15, 0
    %p78 = por %p76, %p77
    %p79 = scmp.ne.s32.totalorder %s67, %s68
    %p80 = scmp.eq.s32.totalorder %s16, 1
    %p81 = por %p79, %p80
    %p83 = scmp.ne.s32.totalorder %s68, %s82
    %p84 = scmp.eq.s32.totalorder %s16, 0
    %p85 = por %p83, %p84
    %s87 = sadd.s32 %s86, 1
    %p90 = scmp.eq.s32.totalorder %s10, 1
    %p91 = scmp.ne.s32.totalorder %s86, %s88
    %p92 = scmp.eq.s32.totalorder %s10, 0
    %p93 = por %p91, %p92
    %p94 = scmp.ne.s32.totalorder %s86, %s88
    %p95 = scmp.eq.s32.totalorder %s15, 1
    %p96 = por %p94, %p95
    %p97 = scmp.ne.s32.totalorder %s88, %s89
    %p98 = scmp.eq.s32.totalorder %s15, 0
    %p99 = por %p97, %p98
    %p100 = scmp.ne.s32.totalorder %s88, %s89
    %p101 = scmp.eq.s32.totalorder %s16, 1
    %p102 = por %p100, %p101
    %p104 = scmp.ne.s32.totalorder %s89, %s103
    %p105 = scmp.eq.s32.totalorder %s16, 0
    %p106 = por %p104, %p105
    %s107 = ssub.s32 %s10, %s17
    %p108 = scmp.eq.s32.totalorder %s107, 0
    %s110 = sadd.s32 %s109, 1
    %s111 = scalar_select %p108, %s109, %s110
    %p114 = pneg %p108
    %p115 = scmp.eq.s32.totalorder %s10, 1
    %p116 = por %p114, %p115
    %p117 = scmp.ne.s32.totalorder %s109, %s112
    %p118 = scmp.eq.s32.totalorder %s10, 0
    %p119 = por %p117, %p118
    %p120 = scmp.ne.s32.totalorder %s109, %s112
    %p121 = scmp.eq.s32.totalorder %s15, 1
    %p122 = por %p120, %p121
    %p123 = scmp.ne.s32.totalorder %s112, %s113
    %p124 = scmp.eq.s32.totalorder %s15, 0
    %p125 = por %p123, %p124
    %p126 = scmp.ne.s32.totalorder %s112, %s113
    %p127 = scmp.eq.s32.totalorder %s16, 1
    %p128 = por %p126, %p127
    %p130 = scmp.ne.s32.totalorder %s113, %s129
    %p131 = scmp.eq.s32.totalorder %s16, 0
    %p132 = por %p130, %p131
    %p133 = scmp.le.s32.totalorder 1, %s10
    %p134 = scmp.lt.s32.totalorder %s10, 3
    %p135 = pnand %p133, %p134
    %p136 = pneg %p135
    // Predicated region
    $region9: #{xbasic_block_forward.1} parent=5 // pred_check
      _
    $region10: #{xbasic_block_forward.1} parent=5 // pred_check_branch
      %138 = sbr.rel (%p135) target = $region12
    $region11: #{xbasic_block_forward.1} parent=5 // pred_region
      %s139 = ssub.s32 %s10, 1
      // Predicated region
      $region13: #{xbasic_block_forward.1} parent=11 // pred_check
        %p140 = pneg %p57
      $region14: #{xbasic_block_forward.1} parent=11 // pred_check_branch
        %142 = sbr.rel (%p140) target = $region16
      $region15: #{xbasic_block_forward.1} parent=11 // pred_region
        _
      $region16: #{xbasic_block_forward.1} parent=11 // pred_fallthru
        _
      // Predicated region
      $region17: #{xbasic_block_forward.1} parent=11 // pred_check
        %p143 = pneg %p78
      $region18: #{xbasic_block_forward.1} parent=11 // pred_check_branch
        %145 = sbr.rel (%p143) target = $region20
      $region19: #{xbasic_block_forward.1} parent=11 // pred_region
        _
      $region20: #{xbasic_block_forward.1} parent=11 // pred_fallthru
        _
      // Predicated region
      $region21: #{xbasic_block_forward.1} parent=11 // pred_check
        %p146 = pneg %p99
      $region22: #{xbasic_block_forward.1} parent=11 // pred_check_branch
        %148 = sbr.rel (%p146) target = $region24
      $region23: #{xbasic_block_forward.1} parent=11 // pred_region
        _
      $region24: #{xbasic_block_forward.1} parent=11 // pred_fallthru
        _
    $region12: #{xbasic_block_forward.1} parent=5 // pred_fallthru
      _
    %p149 = scmp.lt.s32.totalorder %s10, 2
    // Predicated region
    $region25: #{xbasic_block_forward.1} parent=5 // pred_check
      %p150 = pneg %p149
    $region26: #{xbasic_block_forward.1} parent=5 // pred_check_branch
      %152 = sbr.rel (%p150) target = $region28
    $region27: #{xbasic_block_forward.1} parent=5 // pred_region
      // Predicated region
      $region29: #{xbasic_block_forward.1} parent=27 // pred_check
        %p153 = pneg %p30
      $region30: #{xbasic_block_forward.1} parent=27 // pred_check_branch
        %155 = sbr.rel (%p153) target = $region32
      $region31: #{xbasic_block_forward.1} parent=27 // pred_region
        %s156 = smul.u32 2, %s10
        %p157 = scmp.lt.s32.totalorder %s156, 3
        %s158 = scalar_select %p157, %s156, 3
        %s159 = smul.addr %s158, 2
        %s160 = smul.addr %s159, 8
        %s161 = scalar_lea.vmem %s0, %s160
        %s162 = smul.u32 2, %s10
      $region32: #{xbasic_block_forward.1} parent=27 // pred_fallthru
        _
    $region28: #{xbasic_block_forward.1} parent=5 // pred_fallthru
      _
    %p163 = scmp.le.s32.totalorder 1, %s10
    %p164 = scmp.lt.s32.totalorder %s10, 3
    %p165 = pnand %p163, %p164
    %p166 = pneg %p165
    // Predicated region
    $region33: #{xbasic_block_forward.1} parent=5 // pred_check
      _
    $region34: #{xbasic_block_forward.1} parent=5 // pred_check_branch
      %168 = sbr.rel (%p165) target = $region36
    $region35: #{xbasic_block_forward.1} parent=5 // pred_region
      %s169 = ssub.s32 %s10, 1
      %s170 = smul.u32 2, %s15
      %p171 = scmp.lt.s32.totalorder %s170, 3
      %s172 = scalar_select %p171, %s170, 3
      %s173 = smul.addr %s172, 2
      %s174 = smul.addr %s173, 8
      %s175 = scalar_lea.vmem %s0, %s174
      %p176 = pneg %p36
      %p177 = pneg %p33
      %p178 = pneg %p57
      %p179 = pneg %p54
      %p180 = pneg %p78
      %p181 = pneg %p75
      %p182 = pneg %p99
      %p183 = pneg %p96
      %p184 = pneg %p125
      %p185 = pneg %p122
      %s186 = smul.u32 2, %s15
      %p187 = scmp.lt.s32.totalorder %s186, 3
      %s188 = scalar_select %p187, %s186, 3
      %s189 = smul.addr %s188, 2
      %s190 = smul.addr %s189, 8
      %s191 = scalar_lea.vmem %s4, %s190
      %s192 = smul.u32 2, %s15
      %p193 = scmp.lt.s32.totalorder %s192, 3
      %s194 = scalar_select %p193, %s192, 3
      %s195 = smul.addr %s194, 2
      %s196 = smul.addr %s195, 8
      %s197 = scalar_lea.vmem %s0, %s196
      %s198 = smul.u32 2, %s15
      %s199 = smul.u32 2, %s15
      %p200 = scmp.lt.s32.totalorder %s199, 3
      %s201 = scalar_select %p200, %s199, 3
      %s202 = smul.addr %s201, 2
      %s203 = smul.addr %s202, 8
      %s204 = scalar_lea.vmem %s4, %s203
      %s205 = smul.u32 2, %s15
      %206 = vst [vmem:[#allocation2] sm:$0x1] 0.0
      %207 = vst [vmem:[#allocation2 + $0x18] sm:$0x1] 0.0
      %208 = vst [vmem:[#allocation2 + $0x11] sm:$0x1] 0.0
      %209 = vst [vmem:[#allocation2 + $0x29] sm:$0x1] 0.0
      %v210 = vld [vmem:[%s197] sm:$0xff]
      %v211 = vld [vmem:[%s197 + $0x8] sm:$0xff]
      %v212 = vld [vmem:[%s197 + $0x10] sm:$0xff]
      %v213 = vld [vmem:[%s197 + $0x18] sm:$0xff]
      %214 = vst [vmem:[#allocation2 + $0x1] sm:$0xff] %v210
      %215 = vst [vmem:[#allocation2 + $0x9] sm:$0xff] %v211
      %216 = vst [vmem:[#allocation2 + $0x19] sm:$0xff] %v212
      %217 = vst [vmem:[#allocation2 + $0x21] sm:$0xff] %v213
      %v218 = vld [vmem:[#allocation2] sm:$0xff]
      %v219 = vld [vmem:[#allocation2 + $0x8] sm:$0xff]
      %v220 = vld [vmem:[#allocation2 + $0x18] sm:$0xff]
      %v221 = vld [vmem:[#allocation2 + $0x20] sm:$0xff]
      %v222 = vld [vmem:[%s1] sm:$0xff]
      %v223 = vld [vmem:[%s1 + $0x8] sm:$0xff]
      %v224 = vld [vmem:[%s1 + $0x10] sm:$0xff]
      %v225 = vld [vmem:[%s1 + $0x18] sm:$0xff]
      %v226 = vld [vmem:[%s1 + $0x20] sm:$0xff]
      %v227 = vld [vmem:[%s1 + $0x28] sm:$0xff]
      %v228 = vld [vmem:[%s1 + $0x30] sm:$0xff]
      %v229 = vld [vmem:[%s1 + $0x38] sm:$0xff]
      %v230 = vld [vmem:[%s1 + $0x40] sm:$0xff]
      %v231 = vld [vmem:[%s1 + $0x48] sm:$0xff]
      %v232 = vld [vmem:[%s1 + $0x50] sm:$0xff]
      %v233 = vld [vmem:[%s1 + $0x58] sm:$0xff]
      %v234 = vld [vmem:[%s1 + $0x60] sm:$0xff]
      %v235 = vld [vmem:[%s1 + $0x68] sm:$0xff]
      %v236 = vld [vmem:[%s1 + $0x70] sm:$0xff]
      %v237 = vld [vmem:[%s1 + $0x78] sm:$0xff]
      %v238 = vld [vmem:[#allocation2 + $0x1] sm:$0xff]
      %v239 = vld [vmem:[#allocation2 + $0x9] sm:$0xff]
      %v240 = vld [vmem:[#allocation2 + $0x19] sm:$0xff]
      %v241 = vld [vmem:[#allocation2 + $0x21] sm:$0xff]
      %s242 = scalar_lea.vmem %s1, 128
      %v243 = vld [vmem:[%s242] sm:$0xff]
      %v244 = vld [vmem:[%s242 + $0x8] sm:$0xff]
      %v245 = vld [vmem:[%s242 + $0x10] sm:$0xff]
      %v246 = vld [vmem:[%s242 + $0x18] sm:$0xff]
      %v247 = vld [vmem:[%s242 + $0x20] sm:$0xff]
      %v248 = vld [vmem:[%s242 + $0x28] sm:$0xff]
      %v249 = vld [vmem:[%s242 + $0x30] sm:$0xff]
      %v250 = vld [vmem:[%s242 + $0x38] sm:$0xff]
      %v251 = vld [vmem:[%s242 + $0x40] sm:$0xff]
      %v252 = vld [vmem:[%s242 + $0x48] sm:$0xff]
      %v253 = vld [vmem:[%s242 + $0x50] sm:$0xff]
      %v254 = vld [vmem:[%s242 + $0x58] sm:$0xff]
      %v255 = vld [vmem:[%s242 + $0x60] sm:$0xff]
      %v256 = vld [vmem:[%s242 + $0x68] sm:$0xff]
      %v257 = vld [vmem:[%s242 + $0x70] sm:$0xff]
      %v258 = vld [vmem:[%s242 + $0x78] sm:$0xff]
      %259 = vmatprep.subr.mxu0 0.0
      %260 = vmatpush1.msra.mxu0 %v243
      %261 = vmatprep.subr.mxu0 0.0
      %262 = vmatpush1.msra.mxu0 %v244
      %263 = vmatprep.subr.mxu0 0.0
      %264 = vmatpush1.msra.mxu0 %v245
      %265 = vmatprep.subr.mxu0 0.0
      %266 = vmatpush1.msra.mxu0 %v246
      %267 = vmatprep.subr.mxu0 0.0
      %268 = vmatpush1.msra.mxu0 %v247
      %269 = vmatprep.subr.mxu0 0.0
      %270 = vmatpush1.msra.mxu0 %v248
      %271 = vmatprep.subr.mxu0 0.0
      %272 = vmatpush1.msra.mxu0 %v249
      %273 = vmatprep.subr.mxu0 0.0
      %274 = vmatpush1.msra.mxu0 %v250
      %275 = vmatprep.subr.mxu0 0.0
      %276 = vmatpush1.msra.mxu0 %v251
      %277 = vmatprep.subr.mxu0 0.0
      %278 = vmatpush1.msra.mxu0 %v252
      %279 = vmatprep.subr.mxu0 0.0
      %280 = vmatpush1.msra.mxu0 %v253
      %281 = vmatprep.subr.mxu0 0.0
      %282 = vmatpush1.msra.mxu0 %v254
      %283 = vmatprep.subr.mxu0 0.0
      %284 = vmatpush1.msra.mxu0 %v255
      %285 = vmatprep.subr.mxu0 0.0
      %286 = vmatpush1.msra.mxu0 %v256
      %287 = vmatprep.subr.mxu0 0.0
      %288 = vmatpush1.msra.mxu0 %v257
      %289 = vmatprep.subr.mxu0 0.0
      %290 = vmatpush1.msra.mxu0 %v258
      %291 = vmatprep.subr.mxu0 0.0
      %292 = vmatpush1.msra.mxu0 0.0
      %293 = vmatprep.subr.mxu0 0.0
      %294 = vmatpush1.msra.mxu0 0.0
      %295 = vmatprep.subr.mxu0 0.0
      %296 = vmatpush1.msra.mxu0 0.0
      %297 = vmatprep.subr.mxu0 0.0
      %298 = vmatpush1.msra.mxu0 0.0
      %299 = vmatprep.subr.mxu0 0.0
      %300 = vmatpush1.msra.mxu0 0.0
      %301 = vmatprep.subr.mxu0 0.0
      %302 = vmatpush1.msra.mxu0 0.0
      %303 = vmatprep.subr.mxu0 0.0
      %304 = vmatpush1.msra.mxu0 0.0
      %305 = vmatprep.subr.mxu0 0.0
      %306 = vmatpush1.msra.mxu0 0.0
      %307 = vmatprep.subr.mxu0 0.0
      %308 = vmatpush1.msra.mxu0 0.0
      %309 = vmatprep.subr.mxu0 0.0
      %310 = vmatpush1.msra.mxu0 0.0
      %311 = vmatprep.subr.mxu0 0.0
      %312 = vmatpush1.msra.mxu0 0.0
      %313 = vmatprep.subr.mxu0 0.0
      %314 = vmatpush1.msra.mxu0 0.0
      %315 = vmatprep.subr.mxu0 0.0
      %316 = vmatpush1.msra.mxu0 0.0
      %317 = vmatprep.subr.mxu0 0.0
      %318 = vmatpush1.msra.mxu0 0.0
      %319 = vmatprep.subr.mxu0 0.0
      %320 = vmatpush1.msra.mxu0 0.0
      %321 = vmatprep.subr.mxu0 0.0
      %322 = vmatpush1.msra.mxu0 0.0
      %323 = vmatprep.mubr.f32.mxu0 0.0
      %324 = vmatmul.mubr.f32.gmra.mrb[0].mxu0 %v238
      %v325 = vpop.f32.mrb[0].mxu0
      %v326 = vadd.f32 0.0, %v325
      %v327 = vpop.f32.mrb[0].mxu0
      %328 = vmatprep.mubr.f32.mxu0 0.0
      %329 = vmatmul.mubr.f32.gmra.mrb[0].mxu0 %v239
      %v330 = vpop.f32.mrb[0].mxu0
      %v331 = vadd.f32 0.0, %v330
      %v332 = vpop.f32.mrb[0].mxu0
      %333 = vmatprep.mubr.f32.mxu0 0.0
      %334 = vmatmul.mubr.f32.gmra.mrb[0].mxu0 %v240
      %v335 = vpop.f32.mrb[0].mxu0
      %v336 = vadd.f32 0.0, %v335
      %v337 = vpop.f32.mrb[0].mxu0
      %338 = vmatprep.mubr.f32.mxu0 0.0
      %339 = vmatmul.mubr.f32.gmra.mrb[0].mxu0 %v241
      %v340 = vpop.f32.mrb[0].mxu0
      %v341 = vadd.f32 0.0, %v340
      %v342 = vpop.f32.mrb[0].mxu0
      %343 = vdwg.mxu0
      %344 = vmatprep.subr.mxu0 0.0
      %345 = vmatpush1.msra.mxu0 %v222
      %346 = vmatprep.subr.mxu0 0.0
      %347 = vmatpush1.msra.mxu0 %v223
      %348 = vmatprep.subr.mxu0 0.0
      %349 = vmatpush1.msra.mxu0 %v224
      %350 = vmatprep.subr.mxu0 0.0
      %351 = vmatpush1.msra.mxu0 %v225
      %352 = vmatprep.subr.mxu0 0.0
      %353 = vmatpush1.msra.mxu0 %v226
      %354 = vmatprep.subr.mxu0 0.0
      %355 = vmatpush1.msra.mxu0 %v227
      %356 = vmatprep.subr.mxu0 0.0
      %357 = vmatpush1.msra.mxu0 %v228
      %358 = vmatprep.subr.mxu0 0.0
      %359 = vmatpush1.msra.mxu0 %v229
      %360 = vmatprep.subr.mxu0 0.0
      %361 = vmatpush1.msra.mxu0 %v230
      %362 = vmatprep.subr.mxu0 0.0
      %363 = vmatpush1.msra.mxu0 %v231
      %364 = vmatprep.subr.mxu0 0.0
      %365 = vmatpush1.msra.mxu0 %v232
      %366 = vmatprep.subr.mxu0 0.0
      %367 = vmatpush1.msra.mxu0 %v233
      %368 = vmatprep.subr.mxu0 0.0
      %369 = vmatpush1.msra.mxu0 %v234
      %370 = vmatprep.subr.mxu0 0.0
      %371 = vmatpush1.msra.mxu0 %v235
      %372 = vmatprep.subr.mxu0 0.0
      %373 = vmatpush1.msra.mxu0 %v236
      %374 = vmatprep.subr.mxu0 0.0
      %375 = vmatpush1.msra.mxu0 %v237
      %376 = vmatprep.subr.mxu0 0.0
      %377 = vmatpush1.msra.mxu0 0.0
      %378 = vmatprep.subr.mxu0 0.0
      %379 = vmatpush1.msra.mxu0 0.0
      %380 = vmatprep.subr.mxu0 0.0
      %381 = vmatpush1.msra.mxu0 0.0
      %382 = vmatprep.subr.mxu0 0.0
      %383 = vmatpush1.msra.mxu0 0.0
      %384 = vmatprep.subr.mxu0 0.0
      %385 = vmatpush1.msra.mxu0 0.0
      %386 = vmatprep.subr.mxu0 0.0
      %387 = vmatpush1.msra.mxu0 0.0
      %388 = vmatprep.subr.mxu0 0.0
      %389 = vmatpush1.msra.mxu0 0.0
      %390 = vmatprep.subr.mxu0 0.0
      %391 = vmatpush1.msra.mxu0 0.0
      %392 = vmatprep.subr.mxu0 0.0
      %393 = vmatpush1.msra.mxu0 0.0
      %394 = vmatprep.subr.mxu0 0.0
      %395 = vmatpush1.msra.mxu0 0.0
      %396 = vmatprep.subr.mxu0 0.0
      %397 = vmatpush1.msra.mxu0 0.0
      %398 = vmatprep.subr.mxu0 0.0
      %399 = vmatpush1.msra.mxu0 0.0
      %400 = vmatprep.subr.mxu0 0.0
      %401 = vmatpush1.msra.mxu0 0.0
      %402 = vmatprep.subr.mxu0 0.0
      %403 = vmatpush1.msra.mxu0 0.0
      %404 = vmatprep.subr.mxu0 0.0
      %405 = vmatpush1.msra.mxu0 0.0
      %406 = vmatprep.subr.mxu0 0.0
      %407 = vmatpush1.msra.mxu0 0.0
      %408 = vmatprep.mubr.f32.mxu0 0.0
      %409 = vmatmul.mubr.f32.gmra.mrb[0].mxu0 %v218
      %v410 = vpop.f32.mrb[0].mxu0
      %v411 = vadd.f32 %v326, %v410
      %v412 = vpop.f32.mrb[0].mxu0
      %413 = vmatprep.mubr.f32.mxu0 0.0
      %414 = vmatmul.mubr.f32.gmra.mrb[0].mxu0 %v219
      %v415 = vpop.f32.mrb[0].mxu0
      %v416 = vadd.f32 %v331, %v415
      %v417 = vpop.f32.mrb[0].mxu0
      %418 = vmatprep.mubr.f32.mxu0 0.0
      %419 = vmatmul.mubr.f32.gmra.mrb[0].mxu0 %v220
      %v420 = vpop.f32.mrb[0].mxu0
      %v421 = vadd.f32 %v336, %v420
      %v422 = vpop.f32.mrb[0].mxu0
      %423 = vmatprep.mubr.f32.mxu0 0.0
      %424 = vmatmul.mubr.f32.gmra.mrb[0].mxu0 %v221
      %v425 = vpop.f32.mrb[0].mxu0
      %v426 = vadd.f32 %v341, %v425
      %v427 = vpop.f32.mrb[0].mxu0
      %428 = vdwg.mxu0
      %v429 = vld [vmem:[#allocation2 + $0x2] sm:$0xff]
      %v430 = vld [vmem:[#allocation2 + $0xa] sm:$0xff]
      %v431 = vld [vmem:[#allocation2 + $0x1a] sm:$0xff]
      %v432 = vld [vmem:[#allocation2 + $0x22] sm:$0xff]
      %s433 = scalar_lea.vmem %s1, 256
      %v434 = vld [vmem:[%s433] sm:$0xff]
      %v435 = vld [vmem:[%s433 + $0x8] sm:$0xff]
      %v436 = vld [vmem:[%s433 + $0x10] sm:$0xff]
      %v437 = vld [vmem:[%s433 + $0x18] sm:$0xff]
      %v438 = vld [vmem:[%s433 + $0x20] sm:$0xff]
      %v439 = vld [vmem:[%s433 + $0x28] sm:$0xff]
      %v440 = vld [vmem:[%s433 + $0x30] sm:$0xff]
      %v441 = vld [vmem:[%s433 + $0x38] sm:$0xff]
      %v442 = vld [vmem:[%s433 + $0x40] sm:$0xff]
      %v443 = vld [vmem:[%s433 + $0x48] sm:$0xff]
      %v444 = vld [vmem:[%s433 + $0x50] sm:$0xff]
      %v445 = vld [vmem:[%s433 + $0x58] sm:$0xff]
      %v446 = vld [vmem:[%s433 + $0x60] sm:$0xff]
      %v447 = vld [vmem:[%s433 + $0x68] sm:$0xff]
      %v448 = vld [vmem:[%s433 + $0x70] sm:$0xff]
      %v449 = vld [vmem:[%s433 + $0x78] sm:$0xff]
      %450 = vmatprep.subr.mxu0 0.0
      %451 = vmatpush1.msra.mxu0 %v434
      %452 = vmatprep.subr.mxu0 0.0
      %453 = vmatpush1.msra.mxu0 %v435
      %454 = vmatprep.subr.mxu0 0.0
      %455 = vmatpush1.msra.mxu0 %v436
      %456 = vmatprep.subr.mxu0 0.0
      %457 = vmatpush1.msra.mxu0 %v437
      %458 = vmatprep.subr.mxu0 0.0
      %459 = vmatpush1.msra.mxu0 %v438
      %460 = vmatprep.subr.mxu0 0.0
      %461 = vmatpush1.msra.mxu0 %v439
      %462 = vmatprep.subr.mxu0 0.0
      %463 = vmatpush1.msra.mxu0 %v440
      %464 = vmatprep.subr.mxu0 0.0
      %465 = vmatpush1.msra.mxu0 %v441
      %466 = vmatprep.subr.mxu0 0.0
      %467 = vmatpush1.msra.mxu0 %v442
      %468 = vmatprep.subr.mxu0 0.0
      %469 = vmatpush1.msra.mxu0 %v443
      %470 = vmatprep.subr.mxu0 0.0
      %471 = vmatpush1.msra.mxu0 %v444
      %472 = vmatprep.subr.mxu0 0.0
      %473 = vmatpush1.msra.mxu0 %v445
      %474 = vmatprep.subr.mxu0 0.0
      %475 = vmatpush1.msra.mxu0 %v446
      %476 = vmatprep.subr.mxu0 0.0
      %477 = vmatpush1.msra.mxu0 %v447
      %478 = vmatprep.subr.mxu0 0.0
      %479 = vmatpush1.msra.mxu0 %v448
      %480 = vmatprep.subr.mxu0 0.0
      %481 = vmatpush1.msra.mxu0 %v449
      %482 = vmatprep.subr.mxu0 0.0
      %483 = vmatpush1.msra.mxu0 0.0
      %484 = vmatprep.subr.mxu0 0.0
      %485 = vmatpush1.msra.mxu0 0.0
      %486 = vmatprep.subr.mxu0 0.0
      %487 = vmatpush1.msra.mxu0 0.0
      %488 = vmatprep.subr.mxu0 0.0
      %489 = vmatpush1.msra.mxu0 0.0
      %490 = vmatprep.subr.mxu0 0.0
      %491 = vmatpush1.msra.mxu0 0.0
      %492 = vmatprep.subr.mxu0 0.0
      %493 = vmatpush1.msra.mxu0 0.0
      %494 = vmatprep.subr.mxu0 0.0
      %495 = vmatpush1.msra.mxu0 0.0
      %496 = vmatprep.subr.mxu0 0.0
      %497 = vmatpush1.msra.mxu0 0.0
      %498 = vmatprep.subr.mxu0 0.0
      %499 = vmatpush1.msra.mxu0 0.0
      %500 = vmatprep.subr.mxu0 0.0
      %501 = vmatpush1.msra.mxu0 0.0
      %502 = vmatprep.subr.mxu0 0.0
      %503 = vmatpush1.msra.mxu0 0.0
      %504 = vmatprep.subr.mxu0 0.0
      %505 = vmatpush1.msra.mxu0 0.0
      %506 = vmatprep.subr.mxu0 0.0
      %507 = vmatpush1.msra.mxu0 0.0
      %508 = vmatprep.subr.mxu0 0.0
      %509 = vmatpush1.msra.mxu0 0.0
      %510 = vmatprep.subr.mxu0 0.0
      %511 = vmatpush1.msra.mxu0 0.0
      %512 = vmatprep.subr.mxu0 0.0
      %513 = vmatpush1.msra.mxu0 0.0
      %514 = vmatprep.mubr.f32.mxu0 0.0
      %515 = vmatmul.mubr.f32.gmra.mrb[0].mxu0 %v429
      %v516 = vpop.f32.mrb[0].mxu0
      %v517 = vadd.f32 0.0, %v516
      %v518 = vpop.f32.mrb[0].mxu0
      %519 = vmatprep.mubr.f32.mxu0 0.0
      %520 = vmatmul.mubr.f32.gmra.mrb[0].mxu0 %v430
      %v521 = vpop.f32.mrb[0].mxu0
      %v522 = vadd.f32 0.0, %v521
      %v523 = vpop.f32.mrb[0].mxu0
      %524 = vmatprep.mubr.f32.mxu0 0.0
      %525 = vmatmul.mubr.f32.gmra.mrb[0].mxu0 %v431
      %v526 = vpop.f32.mrb[0].mxu0
      %v527 = vadd.f32 0.0, %v526
      %v528 = vpop.f32.mrb[0].mxu0
      %529 = vmatprep.mubr.f32.mxu0 0.0
      %530 = vmatmul.mubr.f32.gmra.mrb[0].mxu0 %v432
      %v531 = vpop.f32.mrb[0].mxu0
      %v532 = vadd.f32 0.0, %v531
      %v533 = vpop.f32.mrb[0].mxu0
      %534 = vdwg.mxu0
      %v535 = vadd.f32 %v411, %v517
      %v536 = vadd.f32 %v416, %v522
      %v537 = vadd.f32 %v421, %v527
      %v538 = vadd.f32 %v426, %v532
      %v539 = vld [vmem:[%s3] sm:$0x1]
      %v540 = vlaneseq
      %v541 = vshrl.u32 %v540, 7
      %v542 = vsub.s32 0, %v541
      %v543 = vrot.slane %v539, %v542
      %v544 = vmul.f32 %v535, %v543
      %v545 = vmul.f32 %v536, %v543
      %v546 = vmul.f32 %v537, %v543
      %v547 = vmul.f32 %v538, %v543
      %v548 = vld [vmem:[%s3 + $0x1] sm:$0x1]
      %v549 = vlaneseq
      %v550 = vshrl.u32 %v549, 7
      %v551 = vsub.s32 0, %v550
      %v552 = vrot.slane %v548, %v551
      %v553 = vadd.f32 %v544, %v552
      %v554 = vadd.f32 %v545, %v552
      %v555 = vadd.f32 %v546, %v552
      %v556 = vadd.f32 %v547, %v552
      %557 = vst [vmem:[#allocation3] sm:$0xf] 0.0
      %558 = vst [vmem:[#allocation3 + $0x18] sm:$0xf] 0.0
      %559 = vst [vmem:[#allocation3 + $0x14] sm:$0xf] 0.0
      %560 = vst [vmem:[#allocation3 + $0x2c] sm:$0xf] 0.0
      %561 = vst [vmem:[#allocation3 + $0x4] sm:$0xff] %v553
      %562 = vst [vmem:[#allocation3 + $0xc] sm:$0xff] %v554
      %563 = vst [vmem:[#allocation3 + $0x1c] sm:$0xff] %v555
      %564 = vst [vmem:[#allocation3 + $0x24] sm:$0xff] %v556
      %v565 = vld [vmem:[#allocation3] sm:$0xff]
      %v566 = vld [vmem:[#allocation3 + $0x8] sm:$0xff]
      %v567 = vld [vmem:[#allocation3 + $0x18] sm:$0xff]
      %v568 = vld [vmem:[#allocation3 + $0x20] sm:$0xff]
      %v569 = vld [vmem:[%s2] sm:$0xff]
      %v570 = vld [vmem:[%s2 + $0x8] sm:$0xff]
      %v571 = vld [vmem:[%s2 + $0x10] sm:$0xff]
      %v572 = vld [vmem:[%s2 + $0x18] sm:$0xff]
      %v573 = vld [vmem:[%s2 + $0x20] sm:$0xff]
      %v574 = vld [vmem:[%s2 + $0x28] sm:$0xff]
      %v575 = vld [vmem:[%s2 + $0x30] sm:$0xff]
      %v576 = vld [vmem:[%s2 + $0x38] sm:$0xff]
      %v577 = vld [vmem:[%s2 + $0x40] sm:$0xff]
      %v578 = vld [vmem:[%s2 + $0x48] sm:$0xff]
      %v579 = vld [vmem:[%s2 + $0x50] sm:$0xff]
      %v580 = vld [vmem:[%s2 + $0x58] sm:$0xff]
      %v581 = vld [vmem:[%s2 + $0x60] sm:$0xff]
      %v582 = vld [vmem:[%s2 + $0x68] sm:$0xff]
      %v583 = vld [vmem:[%s2 + $0x70] sm:$0xff]
      %v584 = vld [vmem:[%s2 + $0x78] sm:$0xff]
      %v585 = vld [vmem:[#allocation3 + $0x1] sm:$0xff]
      %v586 = vld [vmem:[#allocation3 + $0x9] sm:$0xff]
      %v587 = vld [vmem:[#allocation3 + $0x19] sm:$0xff]
      %v588 = vld [vmem:[#allocation3 + $0x21] sm:$0xff]
      %s589 = scalar_lea.vmem %s2, 128
      %v590 = vld [vmem:[%s589] sm:$0xff]
      %v591 = vld [vmem:[%s589 + $0x8] sm:$0xff]
      %v592 = vld [vmem:[%s589 + $0x10] sm:$0xff]
      %v593 = vld [vmem:[%s589 + $0x18] sm:$0xff]
      %v594 = vld [vmem:[%s589 + $0x20] sm:$0xff]
      %v595 = vld [vmem:[%s589 + $0x28] sm:$0xff]
      %v596 = vld [vmem:[%s589 + $0x30] sm:$0xff]
      %v597 = vld [vmem:[%s589 + $0x38] sm:$0xff]
      %v598 = vld [vmem:[%s589 + $0x40] sm:$0xff]
      %v599 = vld [vmem:[%s589 + $0x48] sm:$0xff]
      %v600 = vld [vmem:[%s589 + $0x50] sm:$0xff]
      %v601 = vld [vmem:[%s589 + $0x58] sm:$0xff]
      %v602 = vld [vmem:[%s589 + $0x60] sm:$0xff]
      %v603 = vld [vmem:[%s589 + $0x68] sm:$0xff]
      %v604 = vld [vmem:[%s589 + $0x70] sm:$0xff]
      %v605 = vld [vmem:[%s589 + $0x78] sm:$0xff]
      %606 = vmatprep.subr.mxu0 0.0
      %607 = vmatpush1.msra.mxu0 %v590
      %608 = vmatprep.subr.mxu0 0.0
      %609 = vmatpush1.msra.mxu0 %v591
      %610 = vmatprep.subr.mxu0 0.0
      %611 = vmatpush1.msra.mxu0 %v592
      %612 = vmatprep.subr.mxu0 0.0
      %613 = vmatpush1.msra.mxu0 %v593
      %614 = vmatprep.subr.mxu0 0.0
      %615 = vmatpush1.msra.mxu0 %v594
      %616 = vmatprep.subr.mxu0 0.0
      %617 = vmatpush1.msra.mxu0 %v595
      %618 = vmatprep.subr.mxu0 0.0
      %619 = vmatpush1.msra.mxu0 %v596
      %620 = vmatprep.subr.mxu0 0.0
      %621 = vmatpush1.msra.mxu0 %v597
      %622 = vmatprep.subr.mxu0 0.0
      %623 = vmatpush1.msra.mxu0 %v598
      %624 = vmatprep.subr.mxu0 0.0
      %625 = vmatpush1.msra.mxu0 %v599
      %626 = vmatprep.subr.mxu0 0.0
      %627 = vmatpush1.msra.mxu0 %v600
      %628 = vmatprep.subr.mxu0 0.0
      %629 = vmatpush1.msra.mxu0 %v601
      %630 = vmatprep.subr.mxu0 0.0
      %631 = vmatpush1.msra.mxu0 %v602
      %632 = vmatprep.subr.mxu0 0.0
      %633 = vmatpush1.msra.mxu0 %v603
      %634 = vmatprep.subr.mxu0 0.0
      %635 = vmatpush1.msra.mxu0 %v604
      %636 = vmatprep.subr.mxu0 0.0
      %637 = vmatpush1.msra.mxu0 %v605
      %638 = vmatprep.subr.mxu0 0.0
      %639 = vmatpush1.msra.mxu0 0.0
      %640 = vmatprep.subr.mxu0 0.0
      %641 = vmatpush1.msra.mxu0 0.0
      %642 = vmatprep.subr.mxu0 0.0
      %643 = vmatpush1.msra.mxu0 0.0
      %644 = vmatprep.subr.mxu0 0.0
      %645 = vmatpush1.msra.mxu0 0.0
      %646 = vmatprep.subr.mxu0 0.0
      %647 = vmatpush1.msra.mxu0 0.0
      %648 = vmatprep.subr.mxu0 0.0
      %649 = vmatpush1.msra.mxu0 0.0
      %650 = vmatprep.subr.mxu0 0.0
      %651 = vmatpush1.msra.mxu0 0.0
      %652 = vmatprep.subr.mxu0 0.0
      %653 = vmatpush1.msra.mxu0 0.0
      %654 = vmatprep.subr.mxu0 0.0
      %655 = vmatpush1.msra.mxu0 0.0
      %656 = vmatprep.subr.mxu0 0.0
      %657 = vmatpush1.msra.mxu0 0.0
      %658 = vmatprep.subr.mxu0 0.0
      %659 = vmatpush1.msra.mxu0 0.0
      %660 = vmatprep.subr.mxu0 0.0
      %661 = vmatpush1.msra.mxu0 0.0
      %662 = vmatprep.subr.mxu0 0.0
      %663 = vmatpush1.msra.mxu0 0.0
      %664 = vmatprep.subr.mxu0 0.0
      %665 = vmatpush1.msra.mxu0 0.0
      %666 = vmatprep.subr.mxu0 0.0
      %667 = vmatpush1.msra.mxu0 0.0
      %668 = vmatprep.subr.mxu0 0.0
      %669 = vmatpush1.msra.mxu0 0.0
      %670 = vmatprep.mubr.f32.mxu0 0.0
      %671 = vmatmul.mubr.f32.gmra.mrb[0].mxu0 %v585
      %v672 = vpop.f32.mrb[0].mxu0
      %v673 = vadd.f32 0.0, %v672
      %v674 = vpop.f32.mrb[0].mxu0
      %675 = vmatprep.mubr.f32.mxu0 0.0
      %676 = vmatmul.mubr.f32.gmra.mrb[0].mxu0 %v586
      %v677 = vpop.f32.mrb[0].mxu0
      %v678 = vadd.f32 0.0, %v677
      %v679 = vpop.f32.mrb[0].mxu0
      %680 = vmatprep.mubr.f32.mxu0 0.0
      %681 = vmatmul.mubr.f32.gmra.mrb[0].mxu0 %v587
      %v682 = vpop.f32.mrb[0].mxu0
      %v683 = vadd.f32 0.0, %v682
      %v684 = vpop.f32.mrb[0].mxu0
      %685 = vmatprep.mubr.f32.mxu0 0.0
      %686 = vmatmul.mubr.f32.gmra.mrb[0].mxu0 %v588
      %v687 = vpop.f32.mrb[0].mxu0
      %v688 = vadd.f32 0.0, %v687
      %v689 = vpop.f32.mrb[0].mxu0
      %690 = vdwg.mxu0
      %691 = vmatprep.subr.mxu0 0.0
      %692 = vmatpush1.msra.mxu0 %v569
      %693 = vmatprep.subr.mxu0 0.0
      %694 = vmatpush1.msra.mxu0 %v570
      %695 = vmatprep.subr.mxu0 0.0
      %696 = vmatpush1.msra.mxu0 %v571
      %697 = vmatprep.subr.mxu0 0.0
      %698 = vmatpush1.msra.mxu0 %v572
      %699 = vmatprep.subr.mxu0 0.0
      %700 = vmatpush1.msra.mxu0 %v573
      %701 = vmatprep.subr.mxu0 0.0
      %702 = vmatpush1.msra.mxu0 %v574
      %703 = vmatprep.subr.mxu0 0.0
      %704 = vmatpush1.msra.mxu0 %v575
      %705 = vmatprep.subr.mxu0 0.0
      %706 = vmatpush1.msra.mxu0 %v576
      %707 = vmatprep.subr.mxu0 0.0
      %708 = vmatpush1.msra.mxu0 %v577
      %709 = vmatprep.subr.mxu0 0.0
      %710 = vmatpush1.msra.mxu0 %v578
      %711 = vmatprep.subr.mxu0 0.0
      %712 = vmatpush1.msra.mxu0 %v579
      %713 = vmatprep.subr.mxu0 0.0
      %714 = vmatpush1.msra.mxu0 %v580
      %715 = vmatprep.subr.mxu0 0.0
      %716 = vmatpush1.msra.mxu0 %v581
      %717 = vmatprep.subr.mxu0 0.0
      %718 = vmatpush1.msra.mxu0 %v582
      %719 = vmatprep.subr.mxu0 0.0
      %720 = vmatpush1.msra.mxu0 %v583
      %721 = vmatprep.subr.mxu0 0.0
      %722 = vmatpush1.msra.mxu0 %v584
      %723 = vmatprep.subr.mxu0 0.0
      %724 = vmatpush1.msra.mxu0 0.0
      %725 = vmatprep.subr.mxu0 0.0
      %726 = vmatpush1.msra.mxu0 0.0
      %727 = vmatprep.subr.mxu0 0.0
      %728 = vmatpush1.msra.mxu0 0.0
      %729 = vmatprep.subr.mxu0 0.0
      %730 = vmatpush1.msra.mxu0 0.0
      %731 = vmatprep.subr.mxu0 0.0
      %732 = vmatpush1.msra.mxu0 0.0
      %733 = vmatprep.subr.mxu0 0.0
      %734 = vmatpush1.msra.mxu0 0.0
      %735 = vmatprep.subr.mxu0 0.0
      %736 = vmatpush1.msra.mxu0 0.0
      %737 = vmatprep.subr.mxu0 0.0
      %738 = vmatpush1.msra.mxu0 0.0
      %739 = vmatprep.subr.mxu0 0.0
      %740 = vmatpush1.msra.mxu0 0.0
      %741 = vmatprep.subr.mxu0 0.0
      %742 = vmatpush1.msra.mxu0 0.0
      %743 = vmatprep.subr.mxu0 0.0
      %744 = vmatpush1.msra.mxu0 0.0
      %745 = vmatprep.subr.mxu0 0.0
      %746 = vmatpush1.msra.mxu0 0.0
      %747 = vmatprep.subr.mxu0 0.0
      %748 = vmatpush1.msra.mxu0 0.0
      %749 = vmatprep.subr.mxu0 0.0
      %750 = vmatpush1.msra.mxu0 0.0
      %751 = vmatprep.subr.mxu0 0.0
      %752 = vmatpush1.msra.mxu0 0.0
      %753 = vmatprep.subr.mxu0 0.0
      %754 = vmatpush1.msra.mxu0 0.0
      %755 = vmatprep.mubr.f32.mxu0 0.0
      %756 = vmatmul.mubr.f32.gmra.mrb[0].mxu0 %v565
      %v757 = vpop.f32.mrb[0].mxu0
      %v758 = vadd.f32 %v673, %v757
      %v759 = vpop.f32.mrb[0].mxu0
      %760 = vmatprep.mubr.f32.mxu0 0.0
      %761 = vmatmul.mubr.f32.gmra.mrb[0].mxu0 %v566
      %v762 = vpop.f32.mrb[0].mxu0
      %v763 = vadd.f32 %v678, %v762
      %v764 = vpop.f32.mrb[0].mxu0
      %765 = vmatprep.mubr.f32.mxu0 0.0
      %766 = vmatmul.mubr.f32.gmra.mrb[0].mxu0 %v567
      %v767 = vpop.f32.mrb[0].mxu0
      %v768 = vadd.f32 %v683, %v767
      %v769 = vpop.f32.mrb[0].mxu0
      %770 = vmatprep.mubr.f32.mxu0 0.0
      %771 = vmatmul.mubr.f32.gmra.mrb[0].mxu0 %v568
      %v772 = vpop.f32.mrb[0].mxu0
      %v773 = vadd.f32 %v688, %v772
      %v774 = vpop.f32.mrb[0].mxu0
      %775 = vdwg.mxu0
      %v776 = vld [vmem:[#allocation3 + $0x2] sm:$0xff]
      %v777 = vld [vmem:[#allocation3 + $0xa] sm:$0xff]
      %v778 = vld [vmem:[#allocation3 + $0x1a] sm:$0xff]
      %v779 = vld [vmem:[#allocation3 + $0x22] sm:$0xff]
      %s780 = scalar_lea.vmem %s2, 256
      %v781 = vld [vmem:[%s780] sm:$0xff]
      %v782 = vld [vmem:[%s780 + $0x8] sm:$0xff]
      %v783 = vld [vmem:[%s780 + $0x10] sm:$0xff]
      %v784 = vld [vmem:[%s780 + $0x18] sm:$0xff]
      %v785 = vld [vmem:[%s780 + $0x20] sm:$0xff]
      %v786 = vld [vmem:[%s780 + $0x28] sm:$0xff]
      %v787 = vld [vmem:[%s780 + $0x30] sm:$0xff]
      %v788 = vld [vmem:[%s780 + $0x38] sm:$0xff]
      %v789 = vld [vmem:[%s780 + $0x40] sm:$0xff]
      %v790 = vld [vmem:[%s780 + $0x48] sm:$0xff]
      %v791 = vld [vmem:[%s780 + $0x50] sm:$0xff]
      %v792 = vld [vmem:[%s780 + $0x58] sm:$0xff]
      %v793 = vld [vmem:[%s780 + $0x60] sm:$0xff]
      %v794 = vld [vmem:[%s780 + $0x68] sm:$0xff]
      %v795 = vld [vmem:[%s780 + $0x70] sm:$0xff]
      %v796 = vld [vmem:[%s780 + $0x78] sm:$0xff]
      %797 = vmatprep.subr.mxu0 0.0
      %798 = vmatpush1.msra.mxu0 %v781
      %799 = vmatprep.subr.mxu0 0.0
      %800 = vmatpush1.msra.mxu0 %v782
      %801 = vmatprep.subr.mxu0 0.0
      %802 = vmatpush1.msra.mxu0 %v783
      %803 = vmatprep.subr.mxu0 0.0
      %804 = vmatpush1.msra.mxu0 %v784
      %805 = vmatprep.subr.mxu0 0.0
      %806 = vmatpush1.msra.mxu0 %v785
      %807 = vmatprep.subr.mxu0 0.0
      %808 = vmatpush1.msra.mxu0 %v786
      %809 = vmatprep.subr.mxu0 0.0
      %810 = vmatpush1.msra.mxu0 %v787
      %811 = vmatprep.subr.mxu0 0.0
      %812 = vmatpush1.msra.mxu0 %v788
      %813 = vmatprep.subr.mxu0 0.0
      %814 = vmatpush1.msra.mxu0 %v789
      %815 = vmatprep.subr.mxu0 0.0
      %816 = vmatpush1.msra.mxu0 %v790
      %817 = vmatprep.subr.mxu0 0.0
      %818 = vmatpush1.msra.mxu0 %v791
      %819 = vmatprep.subr.mxu0 0.0
      %820 = vmatpush1.msra.mxu0 %v792
      %821 = vmatprep.subr.mxu0 0.0
      %822 = vmatpush1.msra.mxu0 %v793
      %823 = vmatprep.subr.mxu0 0.0
      %824 = vmatpush1.msra.mxu0 %v794
      %825 = vmatprep.subr.mxu0 0.0
      %826 = vmatpush1.msra.mxu0 %v795
      %827 = vmatprep.subr.mxu0 0.0
      %828 = vmatpush1.msra.mxu0 %v796
      %829 = vmatprep.subr.mxu0 0.0
      %830 = vmatpush1.msra.mxu0 0.0
      %831 = vmatprep.subr.mxu0 0.0
      %832 = vmatpush1.msra.mxu0 0.0
      %833 = vmatprep.subr.mxu0 0.0
      %834 = vmatpush1.msra.mxu0 0.0
      %835 = vmatprep.subr.mxu0 0.0
      %836 = vmatpush1.msra.mxu0 0.0
      %837 = vmatprep.subr.mxu0 0.0
      %838 = vmatpush1.msra.mxu0 0.0
      %839 = vmatprep.subr.mxu0 0.0
      %840 = vmatpush1.msra.mxu0 0.0
      %841 = vmatprep.subr.mxu0 0.0
      %842 = vmatpush1.msra.mxu0 0.0
      %843 = vmatprep.subr.mxu0 0.0
      %844 = vmatpush1.msra.mxu0 0.0
      %845 = vmatprep.subr.mxu0 0.0
      %846 = vmatpush1.msra.mxu0 0.0
      %847 = vmatprep.subr.mxu0 0.0
      %848 = vmatpush1.msra.mxu0 0.0
      %849 = vmatprep.subr.mxu0 0.0
      %850 = vmatpush1.msra.mxu0 0.0
      %851 = vmatprep.subr.mxu0 0.0
      %852 = vmatpush1.msra.mxu0 0.0
      %853 = vmatprep.subr.mxu0 0.0
      %854 = vmatpush1.msra.mxu0 0.0
      %855 = vmatprep.subr.mxu0 0.0
      %856 = vmatpush1.msra.mxu0 0.0
      %857 = vmatprep.subr.mxu0 0.0
      %858 = vmatpush1.msra.mxu0 0.0
      %859 = vmatprep.subr.mxu0 0.0
      %860 = vmatpush1.msra.mxu0 0.0
      %861 = vmatprep.mubr.f32.mxu0 0.0
      %862 = vmatmul.mubr.f32.gmra.mrb[0].mxu0 %v776
      %v863 = vpop.f32.mrb[0].mxu0
      %v864 = vadd.f32 0.0, %v863
      %v865 = vpop.f32.mrb[0].mxu0
      %866 = vmatprep.mubr.f32.mxu0 0.0
      %867 = vmatmul.mubr.f32.gmra.mrb[0].mxu0 %v777
      %v868 = vpop.f32.mrb[0].mxu0
      %v869 = vadd.f32 0.0, %v868
      %v870 = vpop.f32.mrb[0].mxu0
      %871 = vmatprep.mubr.f32.mxu0 0.0
      %872 = vmatmul.mubr.f32.gmra.mrb[0].mxu0 %v778
      %v873 = vpop.f32.mrb[0].mxu0
      %v874 = vadd.f32 0.0, %v873
      %v875 = vpop.f32.mrb[0].mxu0
      %876 = vmatprep.mubr.f32.mxu0 0.0
      %877 = vmatmul.mubr.f32.gmra.mrb[0].mxu0 %v779
      %v878 = vpop.f32.mrb[0].mxu0
      %v879 = vadd.f32 0.0, %v878
      %v880 = vpop.f32.mrb[0].mxu0
      %881 = vdwg.mxu0
      %v882 = vadd.f32 %v758, %v864
      %v883 = vadd.f32 %v763, %v869
      %v884 = vadd.f32 %v768, %v874
      %v885 = vadd.f32 %v773, %v879
      %v886 = vld [vmem:[#allocation3 + $0x3] sm:$0xff]
      %v887 = vld [vmem:[#allocation3 + $0xb] sm:$0xff]
      %v888 = vld [vmem:[#allocation3 + $0x1b] sm:$0xff]
      %v889 = vld [vmem:[#allocation3 + $0x23] sm:$0xff]
      %s890 = scalar_lea.vmem %s2, 384
      %v891 = vld [vmem:[%s890] sm:$0xff]
      %v892 = vld [vmem:[%s890 + $0x8] sm:$0xff]
      %v893 = vld [vmem:[%s890 + $0x10] sm:$0xff]
      %v894 = vld [vmem:[%s890 + $0x18] sm:$0xff]
      %v895 = vld [vmem:[%s890 + $0x20] sm:$0xff]
      %v896 = vld [vmem:[%s890 + $0x28] sm:$0xff]
      %v897 = vld [vmem:[%s890 + $0x30] sm:$0xff]
      %v898 = vld [vmem:[%s890 + $0x38] sm:$0xff]
      %v899 = vld [vmem:[%s890 + $0x40] sm:$0xff]
      %v900 = vld [vmem:[%s890 + $0x48] sm:$0xff]
      %v901 = vld [vmem:[%s890 + $0x50] sm:$0xff]
      %v902 = vld [vmem:[%s890 + $0x58] sm:$0xff]
      %v903 = vld [vmem:[%s890 + $0x60] sm:$0xff]
      %v904 = vld [vmem:[%s890 + $0x68] sm:$0xff]
      %v905 = vld [vmem:[%s890 + $0x70] sm:$0xff]
      %v906 = vld [vmem:[%s890 + $0x78] sm:$0xff]
      %907 = vmatprep.subr.mxu0 0.0
      %908 = vmatpush1.msra.mxu0 %v891
      %909 = vmatprep.subr.mxu0 0.0
      %910 = vmatpush1.msra.mxu0 %v892
      %911 = vmatprep.subr.mxu0 0.0
      %912 = vmatpush1.msra.mxu0 %v893
      %913 = vmatprep.subr.mxu0 0.0
      %914 = vmatpush1.msra.mxu0 %v894
      %915 = vmatprep.subr.mxu0 0.0
      %916 = vmatpush1.msra.mxu0 %v895
      %917 = vmatprep.subr.mxu0 0.0
      %918 = vmatpush1.msra.mxu0 %v896
      %919 = vmatprep.subr.mxu0 0.0
      %920 = vmatpush1.msra.mxu0 %v897
      %921 = vmatprep.subr.mxu0 0.0
      %922 = vmatpush1.msra.mxu0 %v898
      %923 = vmatprep.subr.mxu0 0.0
      %924 = vmatpush1.msra.mxu0 %v899
      %925 = vmatprep.subr.mxu0 0.0
      %926 = vmatpush1.msra.mxu0 %v900
      %927 = vmatprep.subr.mxu0 0.0
      %928 = vmatpush1.msra.mxu0 %v901
      %929 = vmatprep.subr.mxu0 0.0
      %930 = vmatpush1.msra.mxu0 %v902
      %931 = vmatprep.subr.mxu0 0.0
      %932 = vmatpush1.msra.mxu0 %v903
      %933 = vmatprep.subr.mxu0 0.0
      %934 = vmatpush1.msra.mxu0 %v904
      %935 = vmatprep.subr.mxu0 0.0
      %936 = vmatpush1.msra.mxu0 %v905
      %937 = vmatprep.subr.mxu0 0.0
      %938 = vmatpush1.msra.mxu0 %v906
      %939 = vmatprep.subr.mxu0 0.0
      %940 = vmatpush1.msra.mxu0 0.0
      %941 = vmatprep.subr.mxu0 0.0
      %942 = vmatpush1.msra.mxu0 0.0
      %943 = vmatprep.subr.mxu0 0.0
      %944 = vmatpush1.msra.mxu0 0.0
      %945 = vmatprep.subr.mxu0 0.0
      %946 = vmatpush1.msra.mxu0 0.0
      %947 = vmatprep.subr.mxu0 0.0
      %948 = vmatpush1.msra.mxu0 0.0
      %949 = vmatprep.subr.mxu0 0.0
      %950 = vmatpush1.msra.mxu0 0.0
      %951 = vmatprep.subr.mxu0 0.0
      %952 = vmatpush1.msra.mxu0 0.0
      %953 = vmatprep.subr.mxu0 0.0
      %954 = vmatpush1.msra.mxu0 0.0
      %955 = vmatprep.subr.mxu0 0.0
      %956 = vmatpush1.msra.mxu0 0.0
      %957 = vmatprep.subr.mxu0 0.0
      %958 = vmatpush1.msra.mxu0 0.0
      %959 = vmatprep.subr.mxu0 0.0
      %960 = vmatpush1.msra.mxu0 0.0
      %961 = vmatprep.subr.mxu0 0.0
      %962 = vmatpush1.msra.mxu0 0.0
      %963 = vmatprep.subr.mxu0 0.0
      %964 = vmatpush1.msra.mxu0 0.0
      %965 = vmatprep.subr.mxu0 0.0
      %966 = vmatpush1.msra.mxu0 0.0
      %967 = vmatprep.subr.mxu0 0.0
      %968 = vmatpush1.msra.mxu0 0.0
      %969 = vmatprep.subr.mxu0 0.0
      %970 = vmatpush1.msra.mxu0 0.0
      %971 = vmatprep.mubr.f32.mxu0 0.0
      %972 = vmatmul.mubr.f32.gmra.mrb[0].mxu0 %v886
      %v973 = vpop.f32.mrb[0].mxu0
      %v974 = vadd.f32 0.0, %v973
      %v975 = vpop.f32.mrb[0].mxu0
      %976 = vmatprep.mubr.f32.mxu0 0.0
      %977 = vmatmul.mubr.f32.gmra.mrb[0].mxu0 %v887
      %v978 = vpop.f32.mrb[0].mxu0
      %v979 = vadd.f32 0.0, %v978
      %v980 = vpop.f32.mrb[0].mxu0
      %981 = vmatprep.mubr.f32.mxu0 0.0
      %982 = vmatmul.mubr.f32.gmra.mrb[0].mxu0 %v888
      %v983 = vpop.f32.mrb[0].mxu0
      %v984 = vadd.f32 0.0, %v983
      %v985 = vpop.f32.mrb[0].mxu0
      %986 = vmatprep.mubr.f32.mxu0 0.0
      %987 = vmatmul.mubr.f32.gmra.mrb[0].mxu0 %v889
      %v988 = vpop.f32.mrb[0].mxu0
      %v989 = vadd.f32 0.0, %v988
      %v990 = vpop.f32.mrb[0].mxu0
      %991 = vdwg.mxu0
      %v992 = vadd.f32 %v882, %v974
      %v993 = vadd.f32 %v883, %v979
      %v994 = vadd.f32 %v884, %v984
      %v995 = vadd.f32 %v885, %v989
      %v996 = vld [vmem:[#allocation3 + $0x4] sm:$0xff]
      %v997 = vld [vmem:[#allocation3 + $0xc] sm:$0xff]
      %v998 = vld [vmem:[#allocation3 + $0x1c] sm:$0xff]
      %v999 = vld [vmem:[#allocation3 + $0x24] sm:$0xff]
      %s1000 = scalar_lea.vmem %s2, 512
      %v1001 = vld [vmem:[%s1000] sm:$0xff]
      %v1002 = vld [vmem:[%s1000 + $0x8] sm:$0xff]
      %v1003 = vld [vmem:[%s1000 + $0x10] sm:$0xff]
      %v1004 = vld [vmem:[%s1000 + $0x18] sm:$0xff]
      %v1005 = vld [vmem:[%s1000 + $0x20] sm:$0xff]
      %v1006 = vld [vmem:[%s1000 + $0x28] sm:$0xff]
      %v1007 = vld [vmem:[%s1000 + $0x30] sm:$0xff]
      %v1008 = vld [vmem:[%s1000 + $0x38] sm:$0xff]
      %v1009 = vld [vmem:[%s1000 + $0x40] sm:$0xff]
      %v1010 = vld [vmem:[%s1000 + $0x48] sm:$0xff]
      %v1011 = vld [vmem:[%s1000 + $0x50] sm:$0xff]
      %v1012 = vld [vmem:[%s1000 + $0x58] sm:$0xff]
      %v1013 = vld [vmem:[%s1000 + $0x60] sm:$0xff]
      %v1014 = vld [vmem:[%s1000 + $0x68] sm:$0xff]
      %v1015 = vld [vmem:[%s1000 + $0x70] sm:$0xff]
      %v1016 = vld [vmem:[%s1000 + $0x78] sm:$0xff]
      %1017 = vmatprep.subr.mxu0 0.0
      %1018 = vmatpush1.msra.mxu0 %v1001
      %1019 = vmatprep.subr.mxu0 0.0
      %1020 = vmatpush1.msra.mxu0 %v1002
      %1021 = vmatprep.subr.mxu0 0.0
      %1022 = vmatpush1.msra.mxu0 %v1003
      %1023 = vmatprep.subr.mxu0 0.0
      %1024 = vmatpush1.msra.mxu0 %v1004
      %1025 = vmatprep.subr.mxu0 0.0
      %1026 = vmatpush1.msra.mxu0 %v1005
      %1027 = vmatprep.subr.mxu0 0.0
      %1028 = vmatpush1.msra.mxu0 %v1006
      %1029 = vmatprep.subr.mxu0 0.0
      %1030 = vmatpush1.msra.mxu0 %v1007
      %1031 = vmatprep.subr.mxu0 0.0
      %1032 = vmatpush1.msra.mxu0 %v1008
      %1033 = vmatprep.subr.mxu0 0.0
      %1034 = vmatpush1.msra.mxu0 %v1009
      %1035 = vmatprep.subr.mxu0 0.0
      %1036 = vmatpush1.msra.mxu0 %v1010
      %1037 = vmatprep.subr.mxu0 0.0
      %1038 = vmatpush1.msra.mxu0 %v1011
      %1039 = vmatprep.subr.mxu0 0.0
      %1040 = vmatpush1.msra.mxu0 %v1012
      %1041 = vmatprep.subr.mxu0 0.0
      %1042 = vmatpush1.msra.mxu0 %v1013
      %1043 = vmatprep.subr.mxu0 0.0
      %1044 = vmatpush1.msra.mxu0 %v1014
      %1045 = vmatprep.subr.mxu0 0.0
      %1046 = vmatpush1.msra.mxu0 %v1015
      %1047 = vmatprep.subr.mxu0 0.0
      %1048 = vmatpush1.msra.mxu0 %v1016
      %1049 = vmatprep.subr.mxu0 0.0
      %1050 = vmatpush1.msra.mxu0 0.0
      %1051 = vmatprep.subr.mxu0 0.0
      %1052 = vmatpush1.msra.mxu0 0.0
      %1053 = vmatprep.subr.mxu0 0.0
      %1054 = vmatpush1.msra.mxu0 0.0
      %1055 = vmatprep.subr.mxu0 0.0
      %1056 = vmatpush1.msra.mxu0 0.0
      %1057 = vmatprep.subr.mxu0 0.0
      %1058 = vmatpush1.msra.mxu0 0.0
      %1059 = vmatprep.subr.mxu0 0.0
      %1060 = vmatpush1.msra.mxu0 0.0
      %1061 = vmatprep.subr.mxu0 0.0
      %1062 = vmatpush1.msra.mxu0 0.0
      %1063 = vmatprep.subr.mxu0 0.0
      %1064 = vmatpush1.msra.mxu0 0.0
      %1065 = vmatprep.subr.mxu0 0.0
      %1066 = vmatpush1.msra.mxu0 0.0
      %1067 = vmatprep.subr.mxu0 0.0
      %1068 = vmatpush1.msra.mxu0 0.0
      %1069 = vmatprep.subr.mxu0 0.0
      %1070 = vmatpush1.msra.mxu0 0.0
      %1071 = vmatprep.subr.mxu0 0.0
      %1072 = vmatpush1.msra.mxu0 0.0
      %1073 = vmatprep.subr.mxu0 0.0
      %1074 = vmatpush1.msra.mxu0 0.0
      %1075 = vmatprep.subr.mxu0 0.0
      %1076 = vmatpush1.msra.mxu0 0.0
      %1077 = vmatprep.subr.mxu0 0.0
      %1078 = vmatpush1.msra.mxu0 0.0
      %1079 = vmatprep.subr.mxu0 0.0
      %1080 = vmatpush1.msra.mxu0 0.0
      %1081 = vmatprep.mubr.f32.mxu0 0.0
      %1082 = vmatmul.mubr.f32.gmra.mrb[0].mxu0 %v996
      %v1083 = vpop.f32.mrb[0].mxu0
      %v1084 = vadd.f32 0.0, %v1083
      %v1085 = vpop.f32.mrb[0].mxu0
      %1086 = vmatprep.mubr.f32.mxu0 0.0
      %1087 = vmatmul.mubr.f32.gmra.mrb[0].mxu0 %v997
      %v1088 = vpop.f32.mrb[0].mxu0
      %v1089 = vadd.f32 0.0, %v1088
      %v1090 = vpop.f32.mrb[0].mxu0
      %1091 = vmatprep.mubr.f32.mxu0 0.0
      %1092 = vmatmul.mubr.f32.gmra.mrb[0].mxu0 %v998
      %v1093 = vpop.f32.mrb[0].mxu0
      %v1094 = vadd.f32 0.0, %v1093
      %v1095 = vpop.f32.mrb[0].mxu0
      %1096 = vmatprep.mubr.f32.mxu0 0.0
      %1097 = vmatmul.mubr.f32.gmra.mrb[0].mxu0 %v999
      %v1098 = vpop.f32.mrb[0].mxu0
      %v1099 = vadd.f32 0.0, %v1098
      %v1100 = vpop.f32.mrb[0].mxu0
      %1101 = vdwg.mxu0
      %v1102 = vadd.f32 %v992, %v1084
      %v1103 = vadd.f32 %v993, %v1089
      %v1104 = vadd.f32 %v994, %v1094
      %v1105 = vadd.f32 %v995, %v1099
      %v1106 = vld [vmem:[#allocation3 + $0x5] sm:$0xff]
      %v1107 = vld [vmem:[#allocation3 + $0xd] sm:$0xff]
      %v1108 = vld [vmem:[#allocation3 + $0x1d] sm:$0xff]
      %v1109 = vld [vmem:[#allocation3 + $0x25] sm:$0xff]
      %s1110 = scalar_lea.vmem %s2, 640
      %v1111 = vld [vmem:[%s1110] sm:$0xff]
      %v1112 = vld [vmem:[%s1110 + $0x8] sm:$0xff]
      %v1113 = vld [vmem:[%s1110 + $0x10] sm:$0xff]
      %v1114 = vld [vmem:[%s1110 + $0x18] sm:$0xff]
      %v1115 = vld [vmem:[%s1110 + $0x20] sm:$0xff]
      %v1116 = vld [vmem:[%s1110 + $0x28] sm:$0xff]
      %v1117 = vld [vmem:[%s1110 + $0x30] sm:$0xff]
      %v1118 = vld [vmem:[%s1110 + $0x38] sm:$0xff]
      %v1119 = vld [vmem:[%s1110 + $0x40] sm:$0xff]
      %v1120 = vld [vmem:[%s1110 + $0x48] sm:$0xff]
      %v1121 = vld [vmem:[%s1110 + $0x50] sm:$0xff]
      %v1122 = vld [vmem:[%s1110 + $0x58] sm:$0xff]
      %v1123 = vld [vmem:[%s1110 + $0x60] sm:$0xff]
      %v1124 = vld [vmem:[%s1110 + $0x68] sm:$0xff]
      %v1125 = vld [vmem:[%s1110 + $0x70] sm:$0xff]
      %v1126 = vld [vmem:[%s1110 + $0x78] sm:$0xff]
      %1127 = vmatprep.subr.mxu0 0.0
      %1128 = vmatpush1.msra.mxu0 %v1111
      %1129 = vmatprep.subr.mxu0 0.0
      %1130 = vmatpush1.msra.mxu0 %v1112
      %1131 = vmatprep.subr.mxu0 0.0
      %1132 = vmatpush1.msra.mxu0 %v1113
      %1133 = vmatprep.subr.mxu0 0.0
      %1134 = vmatpush1.msra.mxu0 %v1114
      %1135 = vmatprep.subr.mxu0 0.0
      %1136 = vmatpush1.msra.mxu0 %v1115
      %1137 = vmatprep.subr.mxu0 0.0
      %1138 = vmatpush1.msra.mxu0 %v1116
      %1139 = vmatprep.subr.mxu0 0.0
      %1140 = vmatpush1.msra.mxu0 %v1117
      %1141 = vmatprep.subr.mxu0 0.0
      %1142 = vmatpush1.msra.mxu0 %v1118
      %1143 = vmatprep.subr.mxu0 0.0
      %1144 = vmatpush1.msra.mxu0 %v1119
      %1145 = vmatprep.subr.mxu0 0.0
      %1146 = vmatpush1.msra.mxu0 %v1120
      %1147 = vmatprep.subr.mxu0 0.0
      %1148 = vmatpush1.msra.mxu0 %v1121
      %1149 = vmatprep.subr.mxu0 0.0
      %1150 = vmatpush1.msra.mxu0 %v1122
      %1151 = vmatprep.subr.mxu0 0.0
      %1152 = vmatpush1.msra.mxu0 %v1123
      %1153 = vmatprep.subr.mxu0 0.0
      %1154 = vmatpush1.msra.mxu0 %v1124
      %1155 = vmatprep.subr.mxu0 0.0
      %1156 = vmatpush1.msra.mxu0 %v1125
      %1157 = vmatprep.subr.mxu0 0.0
      %1158 = vmatpush1.msra.mxu0 %v1126
      %1159 = vmatprep.subr.mxu0 0.0
      %1160 = vmatpush1.msra.mxu0 0.0
      %1161 = vmatprep.subr.mxu0 0.0
      %1162 = vmatpush1.msra.mxu0 0.0
      %1163 = vmatprep.subr.mxu0 0.0
      %1164 = vmatpush1.msra.mxu0 0.0
      %1165 = vmatprep.subr.mxu0 0.0
      %1166 = vmatpush1.msra.mxu0 0.0
      %1167 = vmatprep.subr.mxu0 0.0
      %1168 = vmatpush1.msra.mxu0 0.0
      %1169 = vmatprep.subr.mxu0 0.0
      %1170 = vmatpush1.msra.mxu0 0.0
      %1171 = vmatprep.subr.mxu0 0.0
      %1172 = vmatpush1.msra.mxu0 0.0
      %1173 = vmatprep.subr.mxu0 0.0
      %1174 = vmatpush1.msra.mxu0 0.0
      %1175 = vmatprep.subr.mxu0 0.0
      %1176 = vmatpush1.msra.mxu0 0.0
      %1177 = vmatprep.subr.mxu0 0.0
      %1178 = vmatpush1.msra.mxu0 0.0
      %1179 = vmatprep.subr.mxu0 0.0
      %1180 = vmatpush1.msra.mxu0 0.0
      %1181 = vmatprep.subr.mxu0 0.0
      %1182 = vmatpush1.msra.mxu0 0.0
      %1183 = vmatprep.subr.mxu0 0.0
      %1184 = vmatpush1.msra.mxu0 0.0
      %1185 = vmatprep.subr.mxu0 0.0
      %1186 = vmatpush1.msra.mxu0 0.0
      %1187 = vmatprep.subr.mxu0 0.0
      %1188 = vmatpush1.msra.mxu0 0.0
      %1189 = vmatprep.subr.mxu0 0.0
      %1190 = vmatpush1.msra.mxu0 0.0
      %1191 = vmatprep.mubr.f32.mxu0 0.0
      %1192 = vmatmul.mubr.f32.gmra.mrb[0].mxu0 %v1106
      %v1193 = vpop.f32.mrb[0].mxu0
      %v1194 = vadd.f32 0.0, %v1193
      %v1195 = vpop.f32.mrb[0].mxu0
      %1196 = vmatprep.mubr.f32.mxu0 0.0
      %1197 = vmatmul.mubr.f32.gmra.mrb[0].mxu0 %v1107
      %v1198 = vpop.f32.mrb[0].mxu0
      %v1199 = vadd.f32 0.0, %v1198
      %v1200 = vpop.f32.mrb[0].mxu0
      %1201 = vmatprep.mubr.f32.mxu0 0.0
      %1202 = vmatmul.mubr.f32.gmra.mrb[0].mxu0 %v1108
      %v1203 = vpop.f32.mrb[0].mxu0
      %v1204 = vadd.f32 0.0, %v1203
      %v1205 = vpop.f32.mrb[0].mxu0
      %1206 = vmatprep.mubr.f32.mxu0 0.0
      %1207 = vmatmul.mubr.f32.gmra.mrb[0].mxu0 %v1109
      %v1208 = vpop.f32.mrb[0].mxu0
      %v1209 = vadd.f32 0.0, %v1208
      %v1210 = vpop.f32.mrb[0].mxu0
      %1211 = vdwg.mxu0
      %v1212 = vadd.f32 %v1102, %v1194
      %v1213 = vadd.f32 %v1103, %v1199
      %v1214 = vadd.f32 %v1104, %v1204
      %v1215 = vadd.f32 %v1105, %v1209
      %v1216 = vld [vmem:[#allocation3 + $0x6] sm:$0xff]
      %v1217 = vld [vmem:[#allocation3 + $0xe] sm:$0xff]
      %v1218 = vld [vmem:[#allocation3 + $0x1e] sm:$0xff]
      %v1219 = vld [vmem:[#allocation3 + $0x26] sm:$0xff]
      %s1220 = scalar_lea.vmem %s2, 768
      %v1221 = vld [vmem:[%s1220] sm:$0xff]
      %v1222 = vld [vmem:[%s1220 + $0x8] sm:$0xff]
      %v1223 = vld [vmem:[%s1220 + $0x10] sm:$0xff]
      %v1224 = vld [vmem:[%s1220 + $0x18] sm:$0xff]
      %v1225 = vld [vmem:[%s1220 + $0x20] sm:$0xff]
      %v1226 = vld [vmem:[%s1220 + $0x28] sm:$0xff]
      %v1227 = vld [vmem:[%s1220 + $0x30] sm:$0xff]
      %v1228 = vld [vmem:[%s1220 + $0x38] sm:$0xff]
      %v1229 = vld [vmem:[%s1220 + $0x40] sm:$0xff]
      %v1230 = vld [vmem:[%s1220 + $0x48] sm:$0xff]
      %v1231 = vld [vmem:[%s1220 + $0x50] sm:$0xff]
      %v1232 = vld [vmem:[%s1220 + $0x58] sm:$0xff]
      %v1233 = vld [vmem:[%s1220 + $0x60] sm:$0xff]
      %v1234 = vld [vmem:[%s1220 + $0x68] sm:$0xff]
      %v1235 = vld [vmem:[%s1220 + $0x70] sm:$0xff]
      %v1236 = vld [vmem:[%s1220 + $0x78] sm:$0xff]
      %1237 = vmatprep.subr.mxu0 0.0
      %1238 = vmatpush1.msra.mxu0 %v1221
      %1239 = vmatprep.subr.mxu0 0.0
      %1240 = vmatpush1.msra.mxu0 %v1222
      %1241 = vmatprep.subr.mxu0 0.0
      %1242 = vmatpush1.msra.mxu0 %v1223
      %1243 = vmatprep.subr.mxu0 0.0
      %1244 = vmatpush1.msra.mxu0 %v1224
      %1245 = vmatprep.subr.mxu0 0.0
      %1246 = vmatpush1.msra.mxu0 %v1225
      %1247 = vmatprep.subr.mxu0 0.0
      %1248 = vmatpush1.msra.mxu0 %v1226
      %1249 = vmatprep.subr.mxu0 0.0
      %1250 = vmatpush1.msra.mxu0 %v1227
      %1251 = vmatprep.subr.mxu0 0.0
      %1252 = vmatpush1.msra.mxu0 %v1228
      %1253 = vmatprep.subr.mxu0 0.0
      %1254 = vmatpush1.msra.mxu0 %v1229
      %1255 = vmatprep.subr.mxu0 0.0
      %1256 = vmatpush1.msra.mxu0 %v1230
      %1257 = vmatprep.subr.mxu0 0.0
      %1258 = vmatpush1.msra.mxu0 %v1231
      %1259 = vmatprep.subr.mxu0 0.0
      %1260 = vmatpush1.msra.mxu0 %v1232
      %1261 = vmatprep.subr.mxu0 0.0
      %1262 = vmatpush1.msra.mxu0 %v1233
      %1263 = vmatprep.subr.mxu0 0.0
      %1264 = vmatpush1.msra.mxu0 %v1234
      %1265 = vmatprep.subr.mxu0 0.0
      %1266 = vmatpush1.msra.mxu0 %v1235
      %1267 = vmatprep.subr.mxu0 0.0
      %1268 = vmatpush1.msra.mxu0 %v1236
      %1269 = vmatprep.subr.mxu0 0.0
      %1270 = vmatpush1.msra.mxu0 0.0
      %1271 = vmatprep.subr.mxu0 0.0
      %1272 = vmatpush1.msra.mxu0 0.0
      %1273 = vmatprep.subr.mxu0 0.0
      %1274 = vmatpush1.msra.mxu0 0.0
      %1275 = vmatprep.subr.mxu0 0.0
      %1276 = vmatpush1.msra.mxu0 0.0
      %1277 = vmatprep.subr.mxu0 0.0
      %1278 = vmatpush1.msra.mxu0 0.0
      %1279 = vmatprep.subr.mxu0 0.0
      %1280 = vmatpush1.msra.mxu0 0.0
      %1281 = vmatprep.subr.mxu0 0.0
      %1282 = vmatpush1.msra.mxu0 0.0
      %1283 = vmatprep.subr.mxu0 0.0
      %1284 = vmatpush1.msra.mxu0 0.0
      %1285 = vmatprep.subr.mxu0 0.0
      %1286 = vmatpush1.msra.mxu0 0.0
      %1287 = vmatprep.subr.mxu0 0.0
      %1288 = vmatpush1.msra.mxu0 0.0
      %1289 = vmatprep.subr.mxu0 0.0
      %1290 = vmatpush1.msra.mxu0 0.0
      %1291 = vmatprep.subr.mxu0 0.0
      %1292 = vmatpush1.msra.mxu0 0.0
      %1293 = vmatprep.subr.mxu0 0.0
      %1294 = vmatpush1.msra.mxu0 0.0
      %1295 = vmatprep.subr.mxu0 0.0
      %1296 = vmatpush1.msra.mxu0 0.0
      %1297 = vmatprep.subr.mxu0 0.0
      %1298 = vmatpush1.msra.mxu0 0.0
      %1299 = vmatprep.subr.mxu0 0.0
      %1300 = vmatpush1.msra.mxu0 0.0
      %1301 = vmatprep.mubr.f32.mxu0 0.0
      %1302 = vmatmul.mubr.f32.gmra.mrb[0].mxu0 %v1216
      %v1303 = vpop.f32.mrb[0].mxu0
      %v1304 = vadd.f32 0.0, %v1303
      %v1305 = vpop.f32.mrb[0].mxu0
      %1306 = vmatprep.mubr.f32.mxu0 0.0
      %1307 = vmatmul.mubr.f32.gmra.mrb[0].mxu0 %v1217
      %v1308 = vpop.f32.mrb[0].mxu0
      %v1309 = vadd.f32 0.0, %v1308
      %v1310 = vpop.f32.mrb[0].mxu0
      %1311 = vmatprep.mubr.f32.mxu0 0.0
      %1312 = vmatmul.mubr.f32.gmra.mrb[0].mxu0 %v1218
      %v1313 = vpop.f32.mrb[0].mxu0
      %v1314 = vadd.f32 0.0, %v1313
      %v1315 = vpop.f32.mrb[0].mxu0
      %1316 = vmatprep.mubr.f32.mxu0 0.0
      %1317 = vmatmul.mubr.f32.gmra.mrb[0].mxu0 %v1219
      %v1318 = vpop.f32.mrb[0].mxu0
      %v1319 = vadd.f32 0.0, %v1318
      %v1320 = vpop.f32.mrb[0].mxu0
      %1321 = vdwg.mxu0
      %v1322 = vadd.f32 %v1212, %v1304
      %v1323 = vadd.f32 %v1213, %v1309
      %v1324 = vadd.f32 %v1214, %v1314
      %v1325 = vadd.f32 %v1215, %v1319
      %v1326 = vld [vmem:[#allocation3 + $0x7] sm:$0xff]
      %v1327 = vld [vmem:[#allocation3 + $0xf] sm:$0xff]
      %v1328 = vld [vmem:[#allocation3 + $0x1f] sm:$0xff]
      %v1329 = vld [vmem:[#allocation3 + $0x27] sm:$0xff]
      %s1330 = scalar_lea.vmem %s2, 896
      %v1331 = vld [vmem:[%s1330] sm:$0xff]
      %v1332 = vld [vmem:[%s1330 + $0x8] sm:$0xff]
      %v1333 = vld [vmem:[%s1330 + $0x10] sm:$0xff]
      %v1334 = vld [vmem:[%s1330 + $0x18] sm:$0xff]
      %v1335 = vld [vmem:[%s1330 + $0x20] sm:$0xff]
      %v1336 = vld [vmem:[%s1330 + $0x28] sm:$0xff]
      %v1337 = vld [vmem:[%s1330 + $0x30] sm:$0xff]
      %v1338 = vld [vmem:[%s1330 + $0x38] sm:$0xff]
      %v1339 = vld [vmem:[%s1330 + $0x40] sm:$0xff]
      %v1340 = vld [vmem:[%s1330 + $0x48] sm:$0xff]
      %v1341 = vld [vmem:[%s1330 + $0x50] sm:$0xff]
      %v1342 = vld [vmem:[%s1330 + $0x58] sm:$0xff]
      %v1343 = vld [vmem:[%s1330 + $0x60] sm:$0xff]
      %v1344 = vld [vmem:[%s1330 + $0x68] sm:$0xff]
      %v1345 = vld [vmem:[%s1330 + $0x70] sm:$0xff]
      %v1346 = vld [vmem:[%s1330 + $0x78] sm:$0xff]
      %1347 = vmatprep.subr.mxu0 0.0
      %1348 = vmatpush1.msra.mxu0 %v1331
      %1349 = vmatprep.subr.mxu0 0.0
      %1350 = vmatpush1.msra.mxu0 %v1332
      %1351 = vmatprep.subr.mxu0 0.0
      %1352 = vmatpush1.msra.mxu0 %v1333
      %1353 = vmatprep.subr.mxu0 0.0
      %1354 = vmatpush1.msra.mxu0 %v1334
      %1355 = vmatprep.subr.mxu0 0.0
      %1356 = vmatpush1.msra.mxu0 %v1335
      %1357 = vmatprep.subr.mxu0 0.0
      %1358 = vmatpush1.msra.mxu0 %v1336
      %1359 = vmatprep.subr.mxu0 0.0
      %1360 = vmatpush1.msra.mxu0 %v1337
      %1361 = vmatprep.subr.mxu0 0.0
      %1362 = vmatpush1.msra.mxu0 %v1338
      %1363 = vmatprep.subr.mxu0 0.0
      %1364 = vmatpush1.msra.mxu0 %v1339
      %1365 = vmatprep.subr.mxu0 0.0
      %1366 = vmatpush1.msra.mxu0 %v1340
      %1367 = vmatprep.subr.mxu0 0.0
      %1368 = vmatpush1.msra.mxu0 %v1341
      %1369 = vmatprep.subr.mxu0 0.0
      %1370 = vmatpush1.msra.mxu0 %v1342
      %1371 = vmatprep.subr.mxu0 0.0
      %1372 = vmatpush1.msra.mxu0 %v1343
      %1373 = vmatprep.subr.mxu0 0.0
      %1374 = vmatpush1.msra.mxu0 %v1344
      %1375 = vmatprep.subr.mxu0 0.0
      %1376 = vmatpush1.msra.mxu0 %v1345
      %1377 = vmatprep.subr.mxu0 0.0
      %1378 = vmatpush1.msra.mxu0 %v1346
      %1379 = vmatprep.subr.mxu0 0.0
      %1380 = vmatpush1.msra.mxu0 0.0
      %1381 = vmatprep.subr.mxu0 0.0
      %1382 = vmatpush1.msra.mxu0 0.0
      %1383 = vmatprep.subr.mxu0 0.0
      %1384 = vmatpush1.msra.mxu0 0.0
      %1385 = vmatprep.subr.mxu0 0.0
      %1386 = vmatpush1.msra.mxu0 0.0
      %1387 = vmatprep.subr.mxu0 0.0
      %1388 = vmatpush1.msra.mxu0 0.0
      %1389 = vmatprep.subr.mxu0 0.0
      %1390 = vmatpush1.msra.mxu0 0.0
      %1391 = vmatprep.subr.mxu0 0.0
      %1392 = vmatpush1.msra.mxu0 0.0
      %1393 = vmatprep.subr.mxu0 0.0
      %1394 = vmatpush1.msra.mxu0 0.0
      %1395 = vmatprep.subr.mxu0 0.0
      %1396 = vmatpush1.msra.mxu0 0.0
      %1397 = vmatprep.subr.mxu0 0.0
      %1398 = vmatpush1.msra.mxu0 0.0
      %1399 = vmatprep.subr.mxu0 0.0
      %1400 = vmatpush1.msra.mxu0 0.0
      %1401 = vmatprep.subr.mxu0 0.0
      %1402 = vmatpush1.msra.mxu0 0.0
      %1403 = vmatprep.subr.mxu0 0.0
      %1404 = vmatpush1.msra.mxu0 0.0
      %1405 = vmatprep.subr.mxu0 0.0
      %1406 = vmatpush1.msra.mxu0 0.0
      %1407 = vmatprep.subr.mxu0 0.0
      %1408 = vmatpush1.msra.mxu0 0.0
      %1409 = vmatprep.subr.mxu0 0.0
      %1410 = vmatpush1.msra.mxu0 0.0
      %1411 = vmatprep.mubr.f32.mxu0 0.0
      %1412 = vmatmul.mubr.f32.gmra.mrb[0].mxu0 %v1326
      %v1413 = vpop.f32.mrb[0].mxu0
      %v1414 = vadd.f32 0.0, %v1413
      %v1415 = vpop.f32.mrb[0].mxu0
      %1416 = vmatprep.mubr.f32.mxu0 0.0
      %1417 = vmatmul.mubr.f32.gmra.mrb[0].mxu0 %v1327
      %v1418 = vpop.f32.mrb[0].mxu0
      %v1419 = vadd.f32 0.0, %v1418
      %v1420 = vpop.f32.mrb[0].mxu0
      %1421 = vmatprep.mubr.f32.mxu0 0.0
      %1422 = vmatmul.mubr.f32.gmra.mrb[0].mxu0 %v1328
      %v1423 = vpop.f32.mrb[0].mxu0
      %v1424 = vadd.f32 0.0, %v1423
      %v1425 = vpop.f32.mrb[0].mxu0
      %1426 = vmatprep.mubr.f32.mxu0 0.0
      %1427 = vmatmul.mubr.f32.gmra.mrb[0].mxu0 %v1329
      %v1428 = vpop.f32.mrb[0].mxu0
      %v1429 = vadd.f32 0.0, %v1428
      %v1430 = vpop.f32.mrb[0].mxu0
      %1431 = vdwg.mxu0
      %v1432 = vadd.f32 %v1322, %v1414
      %v1433 = vadd.f32 %v1323, %v1419
      %v1434 = vadd.f32 %v1324, %v1424
      %v1435 = vadd.f32 %v1325, %v1429
      %v1436 = vld [vmem:[#allocation3 + $0x8] sm:$0xff]
      %v1437 = vld [vmem:[#allocation3 + $0x10] sm:$0xff]
      %v1438 = vld [vmem:[#allocation3 + $0x20] sm:$0xff]
      %v1439 = vld [vmem:[#allocation3 + $0x28] sm:$0xff]
      %s1440 = scalar_lea.vmem %s2, 1024
      %v1441 = vld [vmem:[%s1440] sm:$0xff]
      %v1442 = vld [vmem:[%s1440 + $0x8] sm:$0xff]
      %v1443 = vld [vmem:[%s1440 + $0x10] sm:$0xff]
      %v1444 = vld [vmem:[%s1440 + $0x18] sm:$0xff]
      %v1445 = vld [vmem:[%s1440 + $0x20] sm:$0xff]
      %v1446 = vld [vmem:[%s1440 + $0x28] sm:$0xff]
      %v1447 = vld [vmem:[%s1440 + $0x30] sm:$0xff]
      %v1448 = vld [vmem:[%s1440 + $0x38] sm:$0xff]
      %v1449 = vld [vmem:[%s1440 + $0x40] sm:$0xff]
      %v1450 = vld [vmem:[%s1440 + $0x48] sm:$0xff]
      %v1451 = vld [vmem:[%s1440 + $0x50] sm:$0xff]
      %v1452 = vld [vmem:[%s1440 + $0x58] sm:$0xff]
      %v1453 = vld [vmem:[%s1440 + $0x60] sm:$0xff]
      %v1454 = vld [vmem:[%s1440 + $0x68] sm:$0xff]
      %v1455 = vld [vmem:[%s1440 + $0x70] sm:$0xff]
      %v1456 = vld [vmem:[%s1440 + $0x78] sm:$0xff]
      %1457 = vmatprep.subr.mxu0 0.0
      %1458 = vmatpush1.msra.mxu0 %v1441
      %1459 = vmatprep.subr.mxu0 0.0
      %1460 = vmatpush1.msra.mxu0 %v1442
      %1461 = vmatprep.subr.mxu0 0.0
      %1462 = vmatpush1.msra.mxu0 %v1443
      %1463 = vmatprep.subr.mxu0 0.0
      %1464 = vmatpush1.msra.mxu0 %v1444
      %1465 = vmatprep.subr.mxu0 0.0
      %1466 = vmatpush1.msra.mxu0 %v1445
      %1467 = vmatprep.subr.mxu0 0.0
      %1468 = vmatpush1.msra.mxu0 %v1446
      %1469 = vmatprep.subr.mxu0 0.0
      %1470 = vmatpush1.msra.mxu0 %v1447
      %1471 = vmatprep.subr.mxu0 0.0
      %1472 = vmatpush1.msra.mxu0 %v1448
      %1473 = vmatprep.subr.mxu0 0.0
      %1474 = vmatpush1.msra.mxu0 %v1449
      %1475 = vmatprep.subr.mxu0 0.0
      %1476 = vmatpush1.msra.mxu0 %v1450
      %1477 = vmatprep.subr.mxu0 0.0
      %1478 = vmatpush1.msra.mxu0 %v1451
      %1479 = vmatprep.subr.mxu0 0.0
      %1480 = vmatpush1.msra.mxu0 %v1452
      %1481 = vmatprep.subr.mxu0 0.0
      %1482 = vmatpush1.msra.mxu0 %v1453
      %1483 = vmatprep.subr.mxu0 0.0
      %1484 = vmatpush1.msra.mxu0 %v1454
      %1485 = vmatprep.subr.mxu0 0.0
      %1486 = vmatpush1.msra.mxu0 %v1455
      %1487 = vmatprep.subr.mxu0 0.0
      %1488 = vmatpush1.msra.mxu0 %v1456
      %1489 = vmatprep.subr.mxu0 0.0
      %1490 = vmatpush1.msra.mxu0 0.0
      %1491 = vmatprep.subr.mxu0 0.0
      %1492 = vmatpush1.msra.mxu0 0.0
      %1493 = vmatprep.subr.mxu0 0.0
      %1494 = vmatpush1.msra.mxu0 0.0
      %1495 = vmatprep.subr.mxu0 0.0
      %1496 = vmatpush1.msra.mxu0 0.0
      %1497 = vmatprep.subr.mxu0 0.0
      %1498 = vmatpush1.msra.mxu0 0.0
      %1499 = vmatprep.subr.mxu0 0.0
      %1500 = vmatpush1.msra.mxu0 0.0
      %1501 = vmatprep.subr.mxu0 0.0
      %1502 = vmatpush1.msra.mxu0 0.0
      %1503 = vmatprep.subr.mxu0 0.0
      %1504 = vmatpush1.msra.mxu0 0.0
      %1505 = vmatprep.subr.mxu0 0.0
      %1506 = vmatpush1.msra.mxu0 0.0
      %1507 = vmatprep.subr.mxu0 0.0
      %1508 = vmatpush1.msra.mxu0 0.0
      %1509 = vmatprep.subr.mxu0 0.0
      %1510 = vmatpush1.msra.mxu0 0.0
      %1511 = vmatprep.subr.mxu0 0.0
      %1512 = vmatpush1.msra.mxu0 0.0
      %1513 = vmatprep.subr.mxu0 0.0
      %1514 = vmatpush1.msra.mxu0 0.0
      %1515 = vmatprep.subr.mxu0 0.0
      %1516 = vmatpush1.msra.mxu0 0.0
      %1517 = vmatprep.subr.mxu0 0.0
      %1518 = vmatpush1.msra.mxu0 0.0
      %1519 = vmatprep.subr.mxu0 0.0
      %1520 = vmatpush1.msra.mxu0 0.0
      %1521 = vmatprep.mubr.f32.mxu0 0.0
      %1522 = vmatmul.mubr.f32.gmra.mrb[0].mxu0 %v1436
      %v1523 = vpop.f32.mrb[0].mxu0
      %v1524 = vadd.f32 0.0, %v1523
      %v1525 = vpop.f32.mrb[0].mxu0
      %1526 = vmatprep.mubr.f32.mxu0 0.0
      %1527 = vmatmul.mubr.f32.gmra.mrb[0].mxu0 %v1437
      %v1528 = vpop.f32.mrb[0].mxu0
      %v1529 = vadd.f32 0.0, %v1528
      %v1530 = vpop.f32.mrb[0].mxu0
      %1531 = vmatprep.mubr.f32.mxu0 0.0
      %1532 = vmatmul.mubr.f32.gmra.mrb[0].mxu0 %v1438
      %v1533 = vpop.f32.mrb[0].mxu0
      %v1534 = vadd.f32 0.0, %v1533
      %v1535 = vpop.f32.mrb[0].mxu0
      %1536 = vmatprep.mubr.f32.mxu0 0.0
      %1537 = vmatmul.mubr.f32.gmra.mrb[0].mxu0 %v1439
      %v1538 = vpop.f32.mrb[0].mxu0
      %v1539 = vadd.f32 0.0, %v1538
      %v1540 = vpop.f32.mrb[0].mxu0
      %1541 = vdwg.mxu0
      %v1542 = vadd.f32 %v1432, %v1524
      %v1543 = vadd.f32 %v1433, %v1529
      %v1544 = vadd.f32 %v1434, %v1534
      %v1545 = vadd.f32 %v1435, %v1539
      %v1546 = vld [vmem:[%s3 + $0x2] sm:$0x1]
      %v1547 = vlaneseq
      %v1548 = vshrl.u32 %v1547, 7
      %v1549 = vsub.s32 0, %v1548
      %v1550 = vrot.slane %v1546, %v1549
      %v1551 = vmul.f32 %v1542, %v1550
      %v1552 = vmul.f32 %v1543, %v1550
      %v1553 = vmul.f32 %v1544, %v1550
      %v1554 = vmul.f32 %v1545, %v1550
      %v1555 = vld [vmem:[%s3 + $0x3] sm:$0x1]
      %v1556 = vlaneseq
      %v1557 = vshrl.u32 %v1556, 7
      %v1558 = vsub.s32 0, %v1557
      %v1559 = vrot.slane %v1555, %v1558
      %v1560 = vadd.f32 %v1551, %v1559
      %v1561 = vadd.f32 %v1552, %v1559
      %v1562 = vadd.f32 %v1553, %v1559
      %v1563 = vadd.f32 %v1554, %v1559
      %v1564 = vmax.f32 %v1560, -30.0
      %v1565 = vmax.f32 %v1561, -30.0
      %v1566 = vmax.f32 %v1562, -30.0
      %v1567 = vmax.f32 %v1563, -30.0
      %v1568 = vmin.f32 %v1564, 30.0
      %v1569 = vmin.f32 %v1565, 30.0
      %v1570 = vmin.f32 %v1566, 30.0
      %v1571 = vmin.f32 %v1567, 30.0
      %v1572 = vsub.f32 0.0, %v1568
      %v1573 = vsub.f32 0.0, %v1569
      %v1574 = vsub.f32 0.0, %v1570
      %v1575 = vsub.f32 0.0, %v1571
      %v1576 = vmul.f32 %v1572, 1.442695
      %v1577 = vpow.pop %v1576
      %v1578 = vmul.f32 %v1573, 1.442695
      %v1579 = vpow.pop %v1578
      %v1580 = vmul.f32 %v1574, 1.442695
      %v1581 = vpow.pop %v1580
      %v1582 = vmul.f32 %v1575, 1.442695
      %v1583 = vpow.pop %v1582
      %v1584 = vadd.f32 %v1577, 1.0
      %v1585 = vadd.f32 %v1579, 1.0
      %v1586 = vadd.f32 %v1581, 1.0
      %v1587 = vadd.f32 %v1583, 1.0
      %v1588 = vrcp.pop %v1584
      %v1589 = vrcp.pop %v1585
      %v1590 = vrcp.pop %v1586
      %v1591 = vrcp.pop %v1587
      %v1592 = vmul.f32 %v1584, %v1588
      %v1593 = vmul.f32 %v1585, %v1589
      %v1594 = vmul.f32 %v1586, %v1590
      %v1595 = vmul.f32 %v1587, %v1591
      %v1596 = vsub.f32 2.0, %v1592
      %v1597 = vsub.f32 2.0, %v1593
      %v1598 = vsub.f32 2.0, %v1594
      %v1599 = vsub.f32 2.0, %v1595
      %v1600 = vmul.f32 %v1588, %v1596
      %v1601 = vmul.f32 %v1589, %v1597
      %v1602 = vmul.f32 %v1590, %v1598
      %v1603 = vmul.f32 %v1591, %v1599
      %v1604 = vmul.f32 %v553, %v1600
      %v1605 = vmul.f32 %v554, %v1601
      %v1606 = vmul.f32 %v555, %v1602
      %v1607 = vmul.f32 %v556, %v1603
      %1608 = vst [vmem:[%s204] sm:$0xff] %v1604
      %1609 = vst [vmem:[%s204 + $0x8] sm:$0xff] %v1605
      %1610 = vst [vmem:[%s204 + $0x10] sm:$0xff] %v1606
      %1611 = vst [vmem:[%s204 + $0x18] sm:$0xff] %v1607
      %s1612 = smul.u32 2, %s15
      %p1613 = scmp.lt.s32.totalorder %s1612, 3
      %s1614 = scalar_select %p1613, %s1612, 3
      %s1615 = smul.addr %s1614, 2
      %s1616 = smul.addr %s1615, 8
      %s1617 = scalar_lea.vmem %s4, %s1616
      // Predicated region
      $region37: #{xbasic_block_forward.1} parent=35 // pred_check
        %p1618 = pneg %p122
      $region38: #{xbasic_block_forward.1} parent=35 // pred_check_branch
        %1620 = sbr.rel (%p1618) target = $region40
      $region39: #{xbasic_block_forward.1} parent=35 // pred_region
        %s1621 = smul.u32 2, %s15
      $region40: #{xbasic_block_forward.1} parent=35 // pred_fallthru
        _
    $region36: #{xbasic_block_forward.1} parent=5 // pred_fallthru
      _
    %p1622 = scmp.le.s32.totalorder 2, %s10
    // Predicated region
    $region41: #{xbasic_block_forward.1} parent=5 // pred_check
      %p1623 = pneg %p1622
    $region42: #{xbasic_block_forward.1} parent=5 // pred_check_branch
      %1625 = sbr.rel (%p1623) target = $region44
    $region43: #{xbasic_block_forward.1} parent=5 // pred_region
      %s1626 = ssub.s32 %s10, 2
      // Predicated region
      $region45: #{xbasic_block_forward.1} parent=43 // pred_check
        %p1627 = pneg %p128
      $region46: #{xbasic_block_forward.1} parent=43 // pred_check_branch
        %1629 = sbr.rel (%p1627) target = $region48
      $region47: #{xbasic_block_forward.1} parent=43 // pred_region
        %s1630 = smul.u32 2, %s16
        %p1631 = scmp.lt.s32.totalorder %s1630, 3
        %s1632 = scalar_select %p1631, %s1630, 3
        %s1633 = smul.addr %s1632, 2
        %s1634 = smul.addr %s1633, 8
        %s1635 = scalar_lea.vmem %s4, %s1634
      $region48: #{xbasic_block_forward.1} parent=43 // pred_fallthru
        _
    $region44: #{xbasic_block_forward.1} parent=5 // pred_fallthru
      _
  $region6: #{xbasic_block_forward.1} parent=0 // loop_footer
    %s14 = sadd.s32 1, %s10
  $region7: #{xbasic_block_forward.1} parent=0 // loop_footer_branch
    %9 = sbr.rel target = $region3
  $region8: #{xbasic_block_forward.1} parent=0 // loop_exit
    _

</llo_original>
